<compile_context>
chip_gen: v7x
topology: tpu7x:2x2x1
jax: 0.10.0
libtpu: 0.0.40
codegen_flags: <defaults>
</compile_context>

<pallas_src>
from functools import partial

import jax
import jax.numpy as jnp
from jax.experimental import pallas as pl
from jax.experimental.pallas import tpu as pltpu


def _ln_normalize(x, eps=1e-5):
    # PyTorch LayerNorm: biased variance, eps inside rsqrt. Affine is folded into the
    # downstream linear weights wrapper-side, so only the normalization happens here.
    mu = jnp.mean(x, axis=-1, keepdims=True)
    var = jnp.mean((x - mu) ** 2, axis=-1, keepdims=True)
    return (x - mu) * jax.lax.rsqrt(var + eps)


def attn_block_kernel(num_heads, dim_per_head,
                      xq_ref,              # (TQ, D) f32  query-row block of x
                      xf_ref,              # (N,  D) f32  full sequence (K/V source)
                      wq_ref, bq_ref,      # (D, H*Dh) bf16, (1, H*Dh) f32
                      wkv_ref, bkv_ref,    # (D, 2*H*Dh) bf16, (1, 2*H*Dh) f32
                      f1w_ref, f1b_ref,    # (D, D) bf16, (1, D) f32
                      f2w_ref, f2b_ref,    # (D, D) bf16, (1, D) f32
                      o_ref):              # (TQ, D) f32
    H, Dh = num_heads, dim_per_head
    HD = H * Dh

    xq = xq_ref[...]
    xf = xf_ref[...]

    # Pre-norm (affine already folded into the projection weights/biases).
    zq = _ln_normalize(xq)
    zf = _ln_normalize(xf)

    # Q for this row block; fused K|V projection for the full sequence (one matmul).
    q = jnp.dot(zq.astype(jnp.bfloat16), wq_ref[...],
                preferred_element_type=jnp.float32) + bq_ref[...]          # (TQ, H*Dh)
    kv = jnp.dot(zf.astype(jnp.bfloat16), wkv_ref[...],
                 preferred_element_type=jnp.float32) + bkv_ref[...]        # (N, 2*H*Dh)

    q_bf = q.astype(jnp.bfloat16)
    k_bf = kv[:, :HD].astype(jnp.bfloat16)     # 128-lane-boundary slice (free)
    v_bf = kv[:, HD:].astype(jnp.bfloat16)

    # Per-head softmax attention, statically unrolled (H is small).
    # 1/sqrt(Dh) is folded into Wq; 1/num_heads is folded into the V half of Wkv.
    nt = (((1,), (1,)), ((), ()))   # contract last dims: q @ k^T with no transpose
    acc = jnp.zeros(xq.shape, jnp.float32)
    for h in range(H):
        sl = slice(h * Dh, (h + 1) * Dh)
        s = jax.lax.dot_general(q_bf[:, sl], k_bf[:, sl], nt,
                                preferred_element_type=jnp.float32)        # (TQ, N)
        s = s - jnp.max(s, axis=-1, keepdims=True)
        p = jnp.exp(s)
        p = p * pl.reciprocal(jnp.sum(p, axis=-1, keepdims=True), approx=True)
        acc = acc + jnp.dot(p.astype(jnp.bfloat16), v_bf[:, sl],
                            preferred_element_type=jnp.float32)
    x1 = xq + acc                               # residual 1 (dropout == identity)

    # FFN (norm2 affine folded into f1w/f1b).
    z2 = _ln_normalize(x1)
    h1 = jnp.maximum(
        jnp.dot(z2.astype(jnp.bfloat16), f1w_ref[...],
                preferred_element_type=jnp.float32) + f1b_ref[...], 0.0)
    ff = jnp.dot(h1.astype(jnp.bfloat16), f2w_ref[...],
                 preferred_element_type=jnp.float32) + f2b_ref[...]

    o_ref[...] = (x1 + ff).astype(o_ref.dtype)  # residual 2


def _fold_ln_into_linear(ln_w, ln_b, w, b=None):
    """(z * ln_w + ln_b) @ w + b  ==  z @ w_f + b_f   (z = normalized input)."""
    w_f = ln_w.reshape(-1, 1) * w
    b_f = ln_b.reshape(1, -1) @ w
    if b is not None:
        b_f = b_f + b
    return w_f, b_f


def attn_forward(x, params, *, num_heads, block_q=None):
    """x: (N, D) f32; params: the 11 original module arrays (see __main__)."""
    (n1w, n1b, wq, wk, wv, n2w, n2b, f1w, f1b, f2w, f2b) = params
    N, D = x.shape
    Dh = D                       # dim_per_head == h_dim in the module
    H = num_heads
    if block_q is None:
        block_q = min(N, 128)
    assert N % block_q == 0 and block_q % 8 == 0

    # ---- wrapper-side algebraic folding (free, done once at init) ----
    scale = 1.0 / (Dh ** 0.5)
    wq_f, bq_f = _fold_ln_into_linear(n1w, n1b, wq)
    wk_f, bk_f = _fold_ln_into_linear(n1w, n1b, wk)
    wv_f, bv_f = _fold_ln_into_linear(n1w, n1b, wv)
    wq_f, bq_f = wq_f * scale, bq_f * scale        # fold softmax scale into Q
    wv_f, bv_f = wv_f / H, bv_f / H                # fold head-mean into V
    wkv = jnp.concatenate([wk_f, wv_f], axis=1)    # fused K|V projection weight
    bkv = jnp.concatenate([bk_f, bv_f], axis=1)
    f1w_f, f1b_f = _fold_ln_into_linear(n2w, n2b, f1w, f1b)

    bf16 = lambda w: w.astype(jnp.bfloat16)        # MXU-native operand dtype
    f32 = lambda b: b.astype(jnp.float32)
    inputs = (x, x,
              bf16(wq_f), f32(bq_f),
              bf16(wkv), f32(bkv),
              bf16(f1w_f), f32(f1b_f),
              bf16(f2w), f32(f2b))

    def full_spec(a):
        nd = a.ndim
        return pl.BlockSpec(a.shape, lambda i: (0,) * nd)   # resident across the grid

    kernel = partial(attn_block_kernel, H, Dh)
    return pl.pallas_call(
        kernel,
        out_shape=jax.ShapeDtypeStruct((N, D), x.dtype),
        grid=(N // block_q,),
        in_specs=[pl.BlockSpec((block_q, D), lambda i: (i, 0)),   # query-row block
                  full_spec(x)] + [full_spec(a) for a in inputs[2:]],
        out_specs=pl.BlockSpec((block_q, D), lambda i: (i, 0)),
        compiler_params=pltpu.CompilerParams(
            dimension_semantics=("parallel",)),
    )(*inputs)


def ref_forward(x, params, *, num_heads):
    """Pure-JAX f32 reference with the original (unfolded) parameters."""
    (n1w, n1b, wq, wk, wv, n2w, n2b, f1w, f1b, f2w, f2b) = params
    hp = jax.lax.Precision.HIGHEST
    D = x.shape[-1]

    def ln(v, w, b, eps=1e-5):
        mu = jnp.mean(v, -1, keepdims=True)
        var = jnp.mean((v - mu) ** 2, -1, keepdims=True)
        return (v - mu) * jax.lax.rsqrt(var + eps) * w + b

    xn = ln(x, n1w, n1b)
    q = jnp.dot(xn, wq, precision=hp)
    k = jnp.dot(xn, wk, precision=hp)
    v = jnp.dot(xn, wv, precision=hp)
    outs = []
    for h in range(num_heads):
        sl = slice(h * D, (h + 1) * D)
        s = jnp.dot(q[:, sl], k[:, sl].T, precision=hp) / (D ** 0.5)
        p = jax.nn.softmax(s, axis=-1)
        outs.append(jnp.dot(p, v[:, sl], precision=hp))
    aggr = sum(outs) / num_heads
    x1 = x + aggr
    xn2 = ln(x1, n2w, n2b)
    h1 = jax.nn.relu(jnp.dot(xn2, f1w, precision=hp) + f1b)
    ff = jnp.dot(h1, f2w, precision=hp) + f2b
    return x1 + ff


if __name__ == "__main__":
    # Small shapes consistent with the module: seq N=16, h_dim=32, num_heads=4, coords_dim=3.
    N, D, H, C = 16, 32, 4, 3
    NUM_W_PER_DIST = 4

    key = jax.random.PRNGKey(0)
    ks = jax.random.split(key, 16)

    x = jax.random.normal(ks[0], (N, D), dtype=jnp.float32)
    coords = jax.random.normal(ks[1], (N, C), dtype=jnp.float32)   # pe; unused (pe_func None)

    def lin_w(k, fan_in, fan_out):
        bound = 1.0 / (fan_in ** 0.5)
        return jax.random.uniform(k, (fan_in, fan_out), jnp.float32, -bound, bound)

    def lin_b(k, fan_in, fan_out):
        bound = 1.0 / (fan_in ** 0.5)
        return jax.random.uniform(k, (1, fan_out), jnp.float32, -bound, bound)

    # Non-trivial LayerNorm affines so the wrapper-side folding path is exercised.
    n1w = 1.0 + 0.1 * jax.random.normal(ks[11], (1, D), jnp.float32)
    n1b = 0.1 * jax.random.normal(ks[12], (1, D), jnp.float32)
    n2w = 1.0 + 0.1 * jax.random.normal(ks[13], (1, D), jnp.float32)
    n2b = 0.1 * jax.random.normal(ks[14], (1, D), jnp.float32)
    # w_q / w_k / w_v : Linear(D, H*D, bias=False), stored transposed as (D, H*D).
    wq = lin_w(ks[2], D, H * D)
    wk = lin_w(ks[3], D, H * D)
    wv = lin_w(ks[4], D, H * D)
    # ff : Linear(D, D) -> ReLU -> Linear(D, D)
    f1w = lin_w(ks[5], D, D); f1b = lin_b(ks[6], D, D)
    f2w = lin_w(ks[7], D, D); f2b = lin_b(ks[8], D, D)
    # w_rpe : Linear(num_w_per_dist*(coords_dim-1), H*D) — allocated for fidelity, unused.
    w_rpe_w = lin_w(ks[9], NUM_W_PER_DIST * (C - 1), H * D)
    w_rpe_b = lin_b(ks[10], NUM_W_PER_DIST * (C - 1), H * D)
    del w_rpe_w, w_rpe_b, coords  # TODO(synk): used only inside the undefined attention variants.

    params = (n1w, n1b, wq, wk, wv, n2w, n2b, f1w, f1b, f2w, f2b)

    out = attn_forward(x, params, num_heads=H, block_q=8)
    out = jax.block_until_ready(out)

    assert out.shape == (N, D) and out.dtype == jnp.float32
    assert bool(jnp.all(jnp.isfinite(out)))
    ref = ref_forward(x, params, num_heads=H)
    max_err = float(jnp.max(jnp.abs(out - ref)))
    assert max_err < 5e-2, f"max abs error vs f32 reference: {max_err}"
    print("KERNEL_OK")
</pallas_src>

<mosaic_0001>
module attributes {stable_mosaic.version = 11 : i64} {
  func.func @attn_block_kernel(%arg0: i32, %arg1: memref<8x32xf32, #tpu.memory_space<vmem>>, %arg2: memref<16x32xf32, #tpu.memory_space<vmem>>, %arg3: memref<32x128xbf16, #tpu.memory_space<vmem>>, %arg4: memref<1x128xf32, #tpu.memory_space<vmem>>, %arg5: memref<32x256xbf16, #tpu.memory_space<vmem>>, %arg6: memref<1x256xf32, #tpu.memory_space<vmem>>, %arg7: memref<32x32xbf16, #tpu.memory_space<vmem>>, %arg8: memref<1x32xf32, #tpu.memory_space<vmem>>, %arg9: memref<32x32xbf16, #tpu.memory_space<vmem>>, %arg10: memref<1x32xf32, #tpu.memory_space<vmem>>, %arg11: memref<8x32xf32, #tpu.memory_space<vmem>>) attributes {dimension_semantics = [#tpu.dimension_semantics<parallel>], iteration_bounds = array<i64: 2>, scalar_prefetch = 0 : i64, scratch_operands = 0 : i64, tpu.core_type = #tpu.core_type<tc>, window_params = [{transform_indices = @transform_0, window_bounds = array<i64: 8, 32>}, {pipeline_mode = #tpu.pipeline_mode<synchronous>, transform_indices = @transform_1, window_bounds = array<i64: 16, 32>}, {pipeline_mode = #tpu.pipeline_mode<synchronous>, transform_indices = @transform_2, window_bounds = array<i64: 32, 128>}, {pipeline_mode = #tpu.pipeline_mode<synchronous>, transform_indices = @transform_3, window_bounds = array<i64: 1, 128>}, {pipeline_mode = #tpu.pipeline_mode<synchronous>, transform_indices = @transform_4, window_bounds = array<i64: 32, 256>}, {pipeline_mode = #tpu.pipeline_mode<synchronous>, transform_indices = @transform_5, window_bounds = array<i64: 1, 256>}, {pipeline_mode = #tpu.pipeline_mode<synchronous>, transform_indices = @transform_6, window_bounds = array<i64: 32, 32>}, {pipeline_mode = #tpu.pipeline_mode<synchronous>, transform_indices = @transform_7, window_bounds = array<i64: 1, 32>}, {pipeline_mode = #tpu.pipeline_mode<synchronous>, transform_indices = @transform_8, window_bounds = array<i64: 32, 32>}, {pipeline_mode = #tpu.pipeline_mode<synchronous>, transform_indices = @transform_9, window_bounds = array<i64: 1, 32>}, {transform_indices = @transform_10, window_bounds = array<i64: 8, 32>}]} {
    %c0 = arith.constant 0 : index
    %c0_0 = arith.constant 0 : index
    %0 = vector.load %arg1[%c0, %c0_0] : memref<8x32xf32, #tpu.memory_space<vmem>>, vector<8x32xf32>
    %c0_1 = arith.constant 0 : index
    %c0_2 = arith.constant 0 : index
    %1 = vector.load %arg2[%c0_1, %c0_2] : memref<16x32xf32, #tpu.memory_space<vmem>>, vector<16x32xf32>
    %cst = arith.constant dense<0.000000e+00> : vector<8xf32>
    %2 = vector.multi_reduction <add>, %0, %cst [1] : vector<8x32xf32> to vector<8xf32>
    %3 = vector.shape_cast %2 : vector<8xf32> to vector<8x1xf32>
    %cst_3 = arith.constant 3.200000e+01 : f32
    %4 = vector.broadcast %cst_3 : f32 to vector<8x1xf32>
    %5 = arith.divf %3, %4 : vector<8x1xf32>
    %6 = vector.broadcast %5 : vector<8x1xf32> to vector<8x32xf32>
    %7 = arith.subf %0, %6 : vector<8x32xf32>
    %8 = arith.mulf %7, %7 : vector<8x32xf32>
    %cst_4 = arith.constant dense<0.000000e+00> : vector<8xf32>
    %9 = vector.multi_reduction <add>, %8, %cst_4 [1] : vector<8x32xf32> to vector<8xf32>
    %10 = vector.shape_cast %9 : vector<8xf32> to vector<8x1xf32>
    %cst_5 = arith.constant 3.200000e+01 : f32
    %11 = vector.broadcast %cst_5 : f32 to vector<8x1xf32>
    %12 = arith.divf %10, %11 : vector<8x1xf32>
    %13 = vector.broadcast %5 : vector<8x1xf32> to vector<8x32xf32>
    %14 = arith.subf %0, %13 : vector<8x32xf32>
    %cst_6 = arith.constant 9.99999974E-6 : f32
    %15 = vector.broadcast %cst_6 : f32 to vector<8x1xf32>
    %16 = arith.addf %12, %15 : vector<8x1xf32>
    %17 = math.rsqrt %16 : vector<8x1xf32>
    %18 = vector.broadcast %17 : vector<8x1xf32> to vector<8x32xf32>
    %19 = arith.mulf %14, %18 : vector<8x32xf32>
    %cst_7 = arith.constant dense<0.000000e+00> : vector<16xf32>
    %20 = vector.multi_reduction <add>, %1, %cst_7 [1] : vector<16x32xf32> to vector<16xf32>
    %21 = vector.shape_cast %20 : vector<16xf32> to vector<16x1xf32>
    %cst_8 = arith.constant 3.200000e+01 : f32
    %22 = vector.broadcast %cst_8 : f32 to vector<16x1xf32>
    %23 = arith.divf %21, %22 : vector<16x1xf32>
    %24 = vector.broadcast %23 : vector<16x1xf32> to vector<16x32xf32>
    %25 = arith.subf %1, %24 : vector<16x32xf32>
    %26 = arith.mulf %25, %25 : vector<16x32xf32>
    %cst_9 = arith.constant dense<0.000000e+00> : vector<16xf32>
    %27 = vector.multi_reduction <add>, %26, %cst_9 [1] : vector<16x32xf32> to vector<16xf32>
    %28 = vector.shape_cast %27 : vector<16xf32> to vector<16x1xf32>
    %cst_10 = arith.constant 3.200000e+01 : f32
    %29 = vector.broadcast %cst_10 : f32 to vector<16x1xf32>
    %30 = arith.divf %28, %29 : vector<16x1xf32>
    %31 = vector.broadcast %23 : vector<16x1xf32> to vector<16x32xf32>
    %32 = arith.subf %1, %31 : vector<16x32xf32>
    %cst_11 = arith.constant 9.99999974E-6 : f32
    %33 = vector.broadcast %cst_11 : f32 to vector<16x1xf32>
    %34 = arith.addf %30, %33 : vector<16x1xf32>
    %35 = math.rsqrt %34 : vector<16x1xf32>
    %36 = vector.broadcast %35 : vector<16x1xf32> to vector<16x32xf32>
    %37 = arith.mulf %32, %36 : vector<16x32xf32>
    %38 = arith.truncf %19 : vector<8x32xf32> to vector<8x32xbf16>
    %c0_12 = arith.constant 0 : index
    %c0_13 = arith.constant 0 : index
    %39 = vector.load %arg3[%c0_12, %c0_13] : memref<32x128xbf16, #tpu.memory_space<vmem>>, vector<32x128xbf16>
    %cst_14 = arith.constant dense<0.000000e+00> : vector<8x128xf32>
    %40 = tpu.matmul %38, %39, %cst_14 {dimension_numbers = #tpu.dot_dimension_numbers<[1], [0], [0], [1], [0, 0, 1, 1], [], []>} : vector<8x32xbf16>, vector<32x128xbf16>, vector<8x128xf32> -> vector<8x128xf32>
    %c0_15 = arith.constant 0 : index
    %c0_16 = arith.constant 0 : index
    %41 = vector.load %arg4[%c0_15, %c0_16] : memref<1x128xf32, #tpu.memory_space<vmem>>, vector<1x128xf32>
    %42 = vector.broadcast %41 : vector<1x128xf32> to vector<8x128xf32>
    %43 = arith.addf %40, %42 : vector<8x128xf32>
    %44 = arith.truncf %37 : vector<16x32xf32> to vector<16x32xbf16>
    %c0_17 = arith.constant 0 : index
    %c0_18 = arith.constant 0 : index
    %45 = vector.load %arg5[%c0_17, %c0_18] : memref<32x256xbf16, #tpu.memory_space<vmem>>, vector<32x256xbf16>
    %cst_19 = arith.constant dense<0.000000e+00> : vector<16x256xf32>
    %46 = tpu.matmul %44, %45, %cst_19 {dimension_numbers = #tpu.dot_dimension_numbers<[1], [0], [0], [1], [0, 0, 1, 1], [], []>} : vector<16x32xbf16>, vector<32x256xbf16>, vector<16x256xf32> -> vector<16x256xf32>
    %c0_20 = arith.constant 0 : index
    %c0_21 = arith.constant 0 : index
    %47 = vector.load %arg6[%c0_20, %c0_21] : memref<1x256xf32, #tpu.memory_space<vmem>>, vector<1x256xf32>
    %48 = vector.broadcast %47 : vector<1x256xf32> to vector<16x256xf32>
    %49 = arith.addf %46, %48 : vector<16x256xf32>
    %50 = arith.truncf %43 : vector<8x128xf32> to vector<8x128xbf16>
    %51 = vector.extract_strided_slice %49 {offsets = [0, 0], sizes = [16, 128], strides = [1, 1]} : vector<16x256xf32> to vector<16x128xf32>
    %52 = arith.truncf %51 : vector<16x128xf32> to vector<16x128xbf16>
    %53 = vector.extract_strided_slice %49 {offsets = [0, 128], sizes = [16, 128], strides = [1, 1]} : vector<16x256xf32> to vector<16x128xf32>
    %54 = arith.truncf %53 : vector<16x128xf32> to vector<16x128xbf16>
    %cst_22 = arith.constant 0.000000e+00 : f32
    %55 = vector.broadcast %cst_22 : f32 to vector<8x32xf32>
    %56 = vector.extract_strided_slice %50 {offsets = [0, 0], sizes = [8, 32], strides = [1, 1]} : vector<8x128xbf16> to vector<8x32xbf16>
    %57 = vector.extract_strided_slice %52 {offsets = [0, 0], sizes = [16, 32], strides = [1, 1]} : vector<16x128xbf16> to vector<16x32xbf16>
    %cst_23 = arith.constant dense<0.000000e+00> : vector<8x16xf32>
    %58 = tpu.matmul %56, %57, %cst_23 {dimension_numbers = #tpu.dot_dimension_numbers<[1], [1], [0], [0], [0, 0, 1, 0], [], []>} : vector<8x32xbf16>, vector<16x32xbf16>, vector<8x16xf32> -> vector<8x16xf32>
    %cst_24 = arith.constant dense<0xFF800000> : vector<8xf32>
    %59 = vector.multi_reduction <maximumf>, %58, %cst_24 [1] : vector<8x16xf32> to vector<8xf32>
    %60 = vector.shape_cast %59 : vector<8xf32> to vector<8x1xf32>
    %61 = vector.broadcast %60 : vector<8x1xf32> to vector<8x16xf32>
    %62 = arith.subf %58, %61 : vector<8x16xf32>
    %63 = math.exp %62 : vector<8x16xf32>
    %cst_25 = arith.constant dense<0.000000e+00> : vector<8xf32>
    %64 = vector.multi_reduction <add>, %63, %cst_25 [1] : vector<8x16xf32> to vector<8xf32>
    %65 = vector.shape_cast %64 : vector<8xf32> to vector<8x1xf32>
    %66 = tpu.reciprocal %65 {approx = true} : vector<8x1xf32> -> vector<8x1xf32>
    %67 = vector.broadcast %66 : vector<8x1xf32> to vector<8x16xf32>
    %68 = arith.mulf %63, %67 : vector<8x16xf32>
    %69 = arith.truncf %68 : vector<8x16xf32> to vector<8x16xbf16>
    %70 = vector.extract_strided_slice %54 {offsets = [0, 0], sizes = [16, 32], strides = [1, 1]} : vector<16x128xbf16> to vector<16x32xbf16>
    %cst_26 = arith.constant dense<0.000000e+00> : vector<8x32xf32>
    %71 = tpu.matmul %69, %70, %cst_26 {dimension_numbers = #tpu.dot_dimension_numbers<[1], [0], [0], [1], [0, 0, 1, 1], [], []>} : vector<8x16xbf16>, vector<16x32xbf16>, vector<8x32xf32> -> vector<8x32xf32>
    %72 = arith.addf %55, %71 : vector<8x32xf32>
    %73 = vector.extract_strided_slice %50 {offsets = [0, 32], sizes = [8, 32], strides = [1, 1]} : vector<8x128xbf16> to vector<8x32xbf16>
    %74 = vector.extract_strided_slice %52 {offsets = [0, 32], sizes = [16, 32], strides = [1, 1]} : vector<16x128xbf16> to vector<16x32xbf16>
    %cst_27 = arith.constant dense<0.000000e+00> : vector<8x16xf32>
    %75 = tpu.matmul %73, %74, %cst_27 {dimension_numbers = #tpu.dot_dimension_numbers<[1], [1], [0], [0], [0, 0, 1, 0], [], []>} : vector<8x32xbf16>, vector<16x32xbf16>, vector<8x16xf32> -> vector<8x16xf32>
    %cst_28 = arith.constant dense<0xFF800000> : vector<8xf32>
    %76 = vector.multi_reduction <maximumf>, %75, %cst_28 [1] : vector<8x16xf32> to vector<8xf32>
    %77 = vector.shape_cast %76 : vector<8xf32> to vector<8x1xf32>
    %78 = vector.broadcast %77 : vector<8x1xf32> to vector<8x16xf32>
    %79 = arith.subf %75, %78 : vector<8x16xf32>
    %80 = math.exp %79 : vector<8x16xf32>
    %cst_29 = arith.constant dense<0.000000e+00> : vector<8xf32>
    %81 = vector.multi_reduction <add>, %80, %cst_29 [1] : vector<8x16xf32> to vector<8xf32>
    %82 = vector.shape_cast %81 : vector<8xf32> to vector<8x1xf32>
    %83 = tpu.reciprocal %82 {approx = true} : vector<8x1xf32> -> vector<8x1xf32>
    %84 = vector.broadcast %83 : vector<8x1xf32> to vector<8x16xf32>
    %85 = arith.mulf %80, %84 : vector<8x16xf32>
    %86 = arith.truncf %85 : vector<8x16xf32> to vector<8x16xbf16>
    %87 = vector.extract_strided_slice %54 {offsets = [0, 32], sizes = [16, 32], strides = [1, 1]} : vector<16x128xbf16> to vector<16x32xbf16>
    %cst_30 = arith.constant dense<0.000000e+00> : vector<8x32xf32>
    %88 = tpu.matmul %86, %87, %cst_30 {dimension_numbers = #tpu.dot_dimension_numbers<[1], [0], [0], [1], [0, 0, 1, 1], [], []>} : vector<8x16xbf16>, vector<16x32xbf16>, vector<8x32xf32> -> vector<8x32xf32>
    %89 = arith.addf %72, %88 : vector<8x32xf32>
    %90 = vector.extract_strided_slice %50 {offsets = [0, 64], sizes = [8, 32], strides = [1, 1]} : vector<8x128xbf16> to vector<8x32xbf16>
    %91 = vector.extract_strided_slice %52 {offsets = [0, 64], sizes = [16, 32], strides = [1, 1]} : vector<16x128xbf16> to vector<16x32xbf16>
    %cst_31 = arith.constant dense<0.000000e+00> : vector<8x16xf32>
    %92 = tpu.matmul %90, %91, %cst_31 {dimension_numbers = #tpu.dot_dimension_numbers<[1], [1], [0], [0], [0, 0, 1, 0], [], []>} : vector<8x32xbf16>, vector<16x32xbf16>, vector<8x16xf32> -> vector<8x16xf32>
    %cst_32 = arith.constant dense<0xFF800000> : vector<8xf32>
    %93 = vector.multi_reduction <maximumf>, %92, %cst_32 [1] : vector<8x16xf32> to vector<8xf32>
    %94 = vector.shape_cast %93 : vector<8xf32> to vector<8x1xf32>
    %95 = vector.broadcast %94 : vector<8x1xf32> to vector<8x16xf32>
    %96 = arith.subf %92, %95 : vector<8x16xf32>
    %97 = math.exp %96 : vector<8x16xf32>
    %cst_33 = arith.constant dense<0.000000e+00> : vector<8xf32>
    %98 = vector.multi_reduction <add>, %97, %cst_33 [1] : vector<8x16xf32> to vector<8xf32>
    %99 = vector.shape_cast %98 : vector<8xf32> to vector<8x1xf32>
    %100 = tpu.reciprocal %99 {approx = true} : vector<8x1xf32> -> vector<8x1xf32>
    %101 = vector.broadcast %100 : vector<8x1xf32> to vector<8x16xf32>
    %102 = arith.mulf %97, %101 : vector<8x16xf32>
    %103 = arith.truncf %102 : vector<8x16xf32> to vector<8x16xbf16>
    %104 = vector.extract_strided_slice %54 {offsets = [0, 64], sizes = [16, 32], strides = [1, 1]} : vector<16x128xbf16> to vector<16x32xbf16>
    %cst_34 = arith.constant dense<0.000000e+00> : vector<8x32xf32>
    %105 = tpu.matmul %103, %104, %cst_34 {dimension_numbers = #tpu.dot_dimension_numbers<[1], [0], [0], [1], [0, 0, 1, 1], [], []>} : vector<8x16xbf16>, vector<16x32xbf16>, vector<8x32xf32> -> vector<8x32xf32>
    %106 = arith.addf %89, %105 : vector<8x32xf32>
    %107 = vector.extract_strided_slice %50 {offsets = [0, 96], sizes = [8, 32], strides = [1, 1]} : vector<8x128xbf16> to vector<8x32xbf16>
    %108 = vector.extract_strided_slice %52 {offsets = [0, 96], sizes = [16, 32], strides = [1, 1]} : vector<16x128xbf16> to vector<16x32xbf16>
    %cst_35 = arith.constant dense<0.000000e+00> : vector<8x16xf32>
    %109 = tpu.matmul %107, %108, %cst_35 {dimension_numbers = #tpu.dot_dimension_numbers<[1], [1], [0], [0], [0, 0, 1, 0], [], []>} : vector<8x32xbf16>, vector<16x32xbf16>, vector<8x16xf32> -> vector<8x16xf32>
    %cst_36 = arith.constant dense<0xFF800000> : vector<8xf32>
    %110 = vector.multi_reduction <maximumf>, %109, %cst_36 [1] : vector<8x16xf32> to vector<8xf32>
    %111 = vector.shape_cast %110 : vector<8xf32> to vector<8x1xf32>
    %112 = vector.broadcast %111 : vector<8x1xf32> to vector<8x16xf32>
    %113 = arith.subf %109, %112 : vector<8x16xf32>
    %114 = math.exp %113 : vector<8x16xf32>
    %cst_37 = arith.constant dense<0.000000e+00> : vector<8xf32>
    %115 = vector.multi_reduction <add>, %114, %cst_37 [1] : vector<8x16xf32> to vector<8xf32>
    %116 = vector.shape_cast %115 : vector<8xf32> to vector<8x1xf32>
    %117 = tpu.reciprocal %116 {approx = true} : vector<8x1xf32> -> vector<8x1xf32>
    %118 = vector.broadcast %117 : vector<8x1xf32> to vector<8x16xf32>
    %119 = arith.mulf %114, %118 : vector<8x16xf32>
    %120 = arith.truncf %119 : vector<8x16xf32> to vector<8x16xbf16>
    %121 = vector.extract_strided_slice %54 {offsets = [0, 96], sizes = [16, 32], strides = [1, 1]} : vector<16x128xbf16> to vector<16x32xbf16>
    %cst_38 = arith.constant dense<0.000000e+00> : vector<8x32xf32>
    %122 = tpu.matmul %120, %121, %cst_38 {dimension_numbers = #tpu.dot_dimension_numbers<[1], [0], [0], [1], [0, 0, 1, 1], [], []>} : vector<8x16xbf16>, vector<16x32xbf16>, vector<8x32xf32> -> vector<8x32xf32>
    %123 = arith.addf %106, %122 : vector<8x32xf32>
    %124 = arith.addf %0, %123 : vector<8x32xf32>
    %cst_39 = arith.constant dense<0.000000e+00> : vector<8xf32>
    %125 = vector.multi_reduction <add>, %124, %cst_39 [1] : vector<8x32xf32> to vector<8xf32>
    %126 = vector.shape_cast %125 : vector<8xf32> to vector<8x1xf32>
    %cst_40 = arith.constant 3.200000e+01 : f32
    %127 = vector.broadcast %cst_40 : f32 to vector<8x1xf32>
    %128 = arith.divf %126, %127 : vector<8x1xf32>
    %129 = vector.broadcast %128 : vector<8x1xf32> to vector<8x32xf32>
    %130 = arith.subf %124, %129 : vector<8x32xf32>
    %131 = arith.mulf %130, %130 : vector<8x32xf32>
    %cst_41 = arith.constant dense<0.000000e+00> : vector<8xf32>
    %132 = vector.multi_reduction <add>, %131, %cst_41 [1] : vector<8x32xf32> to vector<8xf32>
    %133 = vector.shape_cast %132 : vector<8xf32> to vector<8x1xf32>
    %cst_42 = arith.constant 3.200000e+01 : f32
    %134 = vector.broadcast %cst_42 : f32 to vector<8x1xf32>
    %135 = arith.divf %133, %134 : vector<8x1xf32>
    %136 = vector.broadcast %128 : vector<8x1xf32> to vector<8x32xf32>
    %137 = arith.subf %124, %136 : vector<8x32xf32>
    %cst_43 = arith.constant 9.99999974E-6 : f32
    %138 = vector.broadcast %cst_43 : f32 to vector<8x1xf32>
    %139 = arith.addf %135, %138 : vector<8x1xf32>
    %140 = math.rsqrt %139 : vector<8x1xf32>
    %141 = vector.broadcast %140 : vector<8x1xf32> to vector<8x32xf32>
    %142 = arith.mulf %137, %141 : vector<8x32xf32>
    %143 = arith.truncf %142 : vector<8x32xf32> to vector<8x32xbf16>
    %c0_44 = arith.constant 0 : index
    %c0_45 = arith.constant 0 : index
    %144 = vector.load %arg7[%c0_44, %c0_45] : memref<32x32xbf16, #tpu.memory_space<vmem>>, vector<32x32xbf16>
    %cst_46 = arith.constant dense<0.000000e+00> : vector<8x32xf32>
    %145 = tpu.matmul %143, %144, %cst_46 {dimension_numbers = #tpu.dot_dimension_numbers<[1], [0], [0], [1], [0, 0, 1, 1], [], []>} : vector<8x32xbf16>, vector<32x32xbf16>, vector<8x32xf32> -> vector<8x32xf32>
    %c0_47 = arith.constant 0 : index
    %c0_48 = arith.constant 0 : index
    %146 = vector.load %arg8[%c0_47, %c0_48] : memref<1x32xf32, #tpu.memory_space<vmem>>, vector<1x32xf32>
    %147 = vector.broadcast %146 : vector<1x32xf32> to vector<8x32xf32>
    %148 = arith.addf %145, %147 : vector<8x32xf32>
    %cst_49 = arith.constant 0.000000e+00 : f32
    %149 = vector.broadcast %cst_49 : f32 to vector<8x32xf32>
    %150 = arith.maximumf %148, %149 : vector<8x32xf32>
    %151 = arith.truncf %150 : vector<8x32xf32> to vector<8x32xbf16>
    %c0_50 = arith.constant 0 : index
    %c0_51 = arith.constant 0 : index
    %152 = vector.load %arg9[%c0_50, %c0_51] : memref<32x32xbf16, #tpu.memory_space<vmem>>, vector<32x32xbf16>
    %cst_52 = arith.constant dense<0.000000e+00> : vector<8x32xf32>
    %153 = tpu.matmul %151, %152, %cst_52 {dimension_numbers = #tpu.dot_dimension_numbers<[1], [0], [0], [1], [0, 0, 1, 1], [], []>} : vector<8x32xbf16>, vector<32x32xbf16>, vector<8x32xf32> -> vector<8x32xf32>
    %c0_53 = arith.constant 0 : index
    %c0_54 = arith.constant 0 : index
    %154 = vector.load %arg10[%c0_53, %c0_54] : memref<1x32xf32, #tpu.memory_space<vmem>>, vector<1x32xf32>
    %155 = vector.broadcast %154 : vector<1x32xf32> to vector<8x32xf32>
    %156 = arith.addf %153, %155 : vector<8x32xf32>
    %157 = arith.addf %124, %156 : vector<8x32xf32>
    %c0_55 = arith.constant 0 : index
    %c0_56 = arith.constant 0 : index
    %158 = vector.load %arg11[%c0_55, %c0_56] : memref<8x32xf32, #tpu.memory_space<vmem>>, vector<8x32xf32>
    tpu.vector_store %arg11[%c0_55, %c0_56], %157 {strides = array<i32>} : memref<8x32xf32, #tpu.memory_space<vmem>>, vector<8x32xf32>,
    return
  }
  func.func @transform_0(%arg0: i32) -> (i32, i32) {
    %c0_i32 = arith.constant 0 : i32
    %c0_i32_0 = arith.constant 0 : i32
    return %arg0, %c0_i32 : i32, i32
  }
  func.func @transform_1(%arg0: i32) -> (i32, i32) {
    %c0_i32 = arith.constant 0 : i32
    %c0_i32_0 = arith.constant 0 : i32
    %c0_i32_1 = arith.constant 0 : i32
    return %c0_i32, %c0_i32_0 : i32, i32
  }
  func.func @transform_2(%arg0: i32) -> (i32, i32) {
    %c0_i32 = arith.constant 0 : i32
    %c0_i32_0 = arith.constant 0 : i32
    %c0_i32_1 = arith.constant 0 : i32
    return %c0_i32, %c0_i32_0 : i32, i32
  }
  func.func @transform_3(%arg0: i32) -> (i32, i32) {
    %c0_i32 = arith.constant 0 : i32
    %c0_i32_0 = arith.constant 0 : i32
    %c0_i32_1 = arith.constant 0 : i32
    return %c0_i32, %c0_i32_0 : i32, i32
  }
  func.func @transform_4(%arg0: i32) -> (i32, i32) {
    %c0_i32 = arith.constant 0 : i32
    %c0_i32_0 = arith.constant 0 : i32
    %c0_i32_1 = arith.constant 0 : i32
    return %c0_i32, %c0_i32_0 : i32, i32
  }
  func.func @transform_5(%arg0: i32) -> (i32, i32) {
    %c0_i32 = arith.constant 0 : i32
    %c0_i32_0 = arith.constant 0 : i32
    %c0_i32_1 = arith.constant 0 : i32
    return %c0_i32, %c0_i32_0 : i32, i32
  }
  func.func @transform_6(%arg0: i32) -> (i32, i32) {
    %c0_i32 = arith.constant 0 : i32
    %c0_i32_0 = arith.constant 0 : i32
    %c0_i32_1 = arith.constant 0 : i32
    return %c0_i32, %c0_i32_0 : i32, i32
  }
  func.func @transform_7(%arg0: i32) -> (i32, i32) {
    %c0_i32 = arith.constant 0 : i32
    %c0_i32_0 = arith.constant 0 : i32
    %c0_i32_1 = arith.constant 0 : i32
    return %c0_i32, %c0_i32_0 : i32, i32
  }
  func.func @transform_8(%arg0: i32) -> (i32, i32) {
    %c0_i32 = arith.constant 0 : i32
    %c0_i32_0 = arith.constant 0 : i32
    %c0_i32_1 = arith.constant 0 : i32
    return %c0_i32, %c0_i32_0 : i32, i32
  }
  func.func @transform_9(%arg0: i32) -> (i32, i32) {
    %c0_i32 = arith.constant 0 : i32
    %c0_i32_0 = arith.constant 0 : i32
    %c0_i32_1 = arith.constant 0 : i32
    return %c0_i32, %c0_i32_0 : i32, i32
  }
  func.func @transform_10(%arg0: i32) -> (i32, i32) {
    %c0_i32 = arith.constant 0 : i32
    %c0_i32_0 = arith.constant 0 : i32
    return %arg0, %c0_i32 : i32, i32
  }
}

</mosaic_0001>

<llo_original>
// kernel: tpu_custom_call.1
$region0: #{tpu_custom_call.1}
  #allocation0 [shape = 'u32[]', space=smem, size = 0x4, offset = 0x4, fixed_abs, tag = 'smem constant byte address 0x4 - core index']
  #allocation1 [shape = 'u32[144,128]{1,0:T(1,128)}', space=vmem, size = 0x12000, scoped, tag = 'internal scratch']
  %s0 = inlined_call_operand.hbm [shape: f32[16,32], index: 0, kind: input, shape index: {}]
  %s1 = inlined_call_operand.hbm [shape: f32[16,32], index: 1, kind: input, shape index: {}]
  %s2 = inlined_call_operand.hbm [shape: bf16[32,128], index: 2, kind: input, shape index: {}]
  %s3 = inlined_call_operand.vmem [shape: f32[1,128], index: 3, kind: input, shape index: {}]
  %s4 = inlined_call_operand.hbm [shape: bf16[32,256], index: 4, kind: input, shape index: {}]
  %s5 = inlined_call_operand.vmem [shape: f32[1,256], index: 5, kind: input, shape index: {}]
  %s6 = inlined_call_operand.vmem [shape: bf16[32,32], index: 6, kind: input, shape index: {}]
  %s7 = inlined_call_operand.vmem [shape: f32[1,32], index: 7, kind: input, shape index: {}]
  %s8 = inlined_call_operand.hbm [shape: bf16[32,32], index: 8, kind: input, shape index: {}]
  %s9 = inlined_call_operand.vmem [shape: f32[1,32], index: 9, kind: input, shape index: {}]
  %s10 = inlined_call_operand.hbm [shape: f32[16,32], index: 10, kind: output, shape index: {}]
  %s11 = sld [smem:[#allocation0]]
  $region93: #{tpu_custom_call.1} parent=0
    _
  %s13 = ssub.s32 1, %s11
  %s14 = scalar_select 0, %s13, %s11
  $region1: #{tpu_custom_call.1} parent=0
    #allocation2 [shape = 'u8[8192]{0}', space=vmem, size = 0x2000, scoped, tag = 'input window, operand 0']
    #allocation3 [shape = 's32[2]{0}', space=sflag, size = 0x8, scoped, tag = 'scoped memory for tpu_custom_call.1']
    #allocation4 [shape = 's32[2]{0}', space=sflag, size = 0x8, scoped, tag = 'scoped memory for tpu_custom_call.1']
    #allocation5 [shape = 'u8[8192]{0}', space=vmem, size = 0x2000, scoped, tag = 'input window, operand 1, single buffered']
    #allocation6 [shape = 's32[1]{0}', space=sflag, size = 0x4, scoped, tag = 'scoped memory for tpu_custom_call.1']
    #allocation7 [shape = 'u8[8192]{0}', space=vmem, size = 0x2000, scoped, tag = 'input window, operand 2, single buffered']
    #allocation8 [shape = 'u8[16384]{0}', space=vmem, size = 0x4000, scoped, tag = 'input window, operand 4, single buffered']
    #allocation9 [shape = 's32[1]{0}', space=sflag, size = 0x4, scoped, tag = 'scoped memory for tpu_custom_call.1']
    #allocation10 [shape = 'u8[8192]{0}', space=vmem, size = 0x2000, scoped, tag = 'input window, operand 8, single buffered']
    #allocation11 [shape = 'u8[8192]{0}', space=vmem, size = 0x2000, scoped, tag = 'output window, operand 0']
    %15 = vsyncpa [#allocation3], 0
    %s16 = scalar_lea.sflag [#allocation3], 1
    %17 = vsyncpa %s16, 0
    %18 = vsyncpa [#allocation6], 0
    %19 = vsyncpa [#allocation9], 0
    %20 = vsyncpa [#allocation4], 0
    %s21 = scalar_lea.sflag [#allocation4], 1
    %22 = vsyncpa %s21, 0
    loop: start=0, step=1, limit=4
    $region2: #{tpu_custom_call.1} parent=1 // loop_pre_header
      _
    $region3: #{tpu_custom_call.1} parent=1 // loop_header
      %s24 = sphi 0, %s28
      %p25 = scmp.ge.s32.totalorder %s24, 4
      %s34 = sphi 0, %s36
      %s37 = sphi 0, %s34
      %s38 = sphi 0, %s37
      %s54 = sphi 0, %s38
      %s58 = sphi 0, %s58
      %s60 = sphi 0, %s58
      %s61 = sphi 0, %s60
      %s75 = sphi 0, %s61
      %s79 = sphi 0, %s79
      %s81 = sphi 0, %s79
      %s82 = sphi 0, %s81
      %s96 = sphi 0, %s82
      %s100 = sphi 0, %s100
      %s102 = sphi 0, %s100
      %s103 = sphi 0, %s102
      %s117 = sphi 0, %s103
      %s121 = sphi 0, %s121
      %s123 = sphi 0, %s121
      %s124 = sphi 0, %s123
      %s138 = sphi 0, %s124
      %s142 = sphi 0, %s142
      %s144 = sphi 0, %s142
      %s145 = sphi 0, %s144
      %s159 = sphi 0, %s145
      %s163 = sphi 0, %s163
      %s165 = sphi 0, %s163
      %s166 = sphi 0, %s165
      %s180 = sphi 0, %s166
      %s184 = sphi 0, %s184
      %s186 = sphi 0, %s184
      %s187 = sphi 0, %s186
      %s201 = sphi 0, %s187
      %s205 = sphi 0, %s205
      %s207 = sphi 0, %s205
      %s208 = sphi 0, %s207
      %s222 = sphi 0, %s208
      %s226 = sphi 0, %s226
      %s228 = sphi 0, %s226
      %s229 = sphi 0, %s228
      %s243 = sphi 0, %s229
      %s249 = sphi 0, %s251
      %s252 = sphi 0, %s249
      %s253 = sphi 0, %s252
      %s269 = sphi 0, %s253
    $region4: #{tpu_custom_call.1} parent=1 // loop_header_branch
      %27 = sbr.rel (%p25) target = $region8
    $region5: #{tpu_custom_call.1} parent=1 // loop_body
      %s29 = ssub.s32 %s24, 1
      %s30 = ssub.s32 %s24, 2
      %s31 = sadd.s32 %s24, 1
      %s32 = ssub.s32 %s24, %s31
      %p33 = scmp.eq.s32.totalorder %s32, 0
      %s35 = sadd.s32 %s34, 1
      %s36 = scalar_select %p33, %s34, %s35
      %p39 = pneg %p33
      %p40 = scmp.eq.s32.totalorder %s24, 1
      %p41 = por %p39, %p40
      %p42 = scmp.ne.s32.totalorder %s34, %s37
      %p43 = scmp.eq.s32.totalorder %s24, 0
      %p44 = por %p42, %p43
      %p45 = scmp.ne.s32.totalorder %s34, %s37
      %p46 = scmp.eq.s32.totalorder %s29, 1
      %p47 = por %p45, %p46
      %p48 = scmp.ne.s32.totalorder %s37, %s38
      %p49 = scmp.eq.s32.totalorder %s29, 0
      %p50 = por %p48, %p49
      %p51 = scmp.ne.s32.totalorder %s37, %s38
      %p52 = scmp.eq.s32.totalorder %s30, 1
      %p53 = por %p51, %p52
      %p55 = scmp.ne.s32.totalorder %s38, %s54
      %p56 = scmp.eq.s32.totalorder %s30, 0
      %p57 = por %p55, %p56
      %s59 = sadd.s32 %s58, 1
      %p62 = scmp.eq.s32.totalorder %s24, 1
      %p63 = scmp.ne.s32.totalorder %s58, %s60
      %p64 = scmp.eq.s32.totalorder %s24, 0
      %p65 = por %p63, %p64
      %p66 = scmp.ne.s32.totalorder %s58, %s60
      %p67 = scmp.eq.s32.totalorder %s29, 1
      %p68 = por %p66, %p67
      %p69 = scmp.ne.s32.totalorder %s60, %s61
      %p70 = scmp.eq.s32.totalorder %s29, 0
      %p71 = por %p69, %p70
      %p72 = scmp.ne.s32.totalorder %s60, %s61
      %p73 = scmp.eq.s32.totalorder %s30, 1
      %p74 = por %p72, %p73
      %p76 = scmp.ne.s32.totalorder %s61, %s75
      %p77 = scmp.eq.s32.totalorder %s30, 0
      %p78 = por %p76, %p77
      %s80 = sadd.s32 %s79, 1
      %p83 = scmp.eq.s32.totalorder %s24, 1
      %p84 = scmp.ne.s32.totalorder %s79, %s81
      %p85 = scmp.eq.s32.totalorder %s24, 0
      %p86 = por %p84, %p85
      %p87 = scmp.ne.s32.totalorder %s79, %s81
      %p88 = scmp.eq.s32.totalorder %s29, 1
      %p89 = por %p87, %p88
      %p90 = scmp.ne.s32.totalorder %s81, %s82
      %p91 = scmp.eq.s32.totalorder %s29, 0
      %p92 = por %p90, %p91
      %p93 = scmp.ne.s32.totalorder %s81, %s82
      %p94 = scmp.eq.s32.totalorder %s30, 1
      %p95 = por %p93, %p94
      %p97 = scmp.ne.s32.totalorder %s82, %s96
      %p98 = scmp.eq.s32.totalorder %s30, 0
      %p99 = por %p97, %p98
      %s101 = sadd.s32 %s100, 1
      %p104 = scmp.eq.s32.totalorder %s24, 1
      %p105 = scmp.ne.s32.totalorder %s100, %s102
      %p106 = scmp.eq.s32.totalorder %s24, 0
      %p107 = por %p105, %p106
      %p108 = scmp.ne.s32.totalorder %s100, %s102
      %p109 = scmp.eq.s32.totalorder %s29, 1
      %p110 = por %p108, %p109
      %p111 = scmp.ne.s32.totalorder %s102, %s103
      %p112 = scmp.eq.s32.totalorder %s29, 0
      %p113 = por %p111, %p112
      %p114 = scmp.ne.s32.totalorder %s102, %s103
      %p115 = scmp.eq.s32.totalorder %s30, 1
      %p116 = por %p114, %p115
      %p118 = scmp.ne.s32.totalorder %s103, %s117
      %p119 = scmp.eq.s32.totalorder %s30, 0
      %p120 = por %p118, %p119
      %s122 = sadd.s32 %s121, 1
      %p125 = scmp.eq.s32.totalorder %s24, 1
      %p126 = scmp.ne.s32.totalorder %s121, %s123
      %p127 = scmp.eq.s32.totalorder %s24, 0
      %p128 = por %p126, %p127
      %p129 = scmp.ne.s32.totalorder %s121, %s123
      %p130 = scmp.eq.s32.totalorder %s29, 1
      %p131 = por %p129, %p130
      %p132 = scmp.ne.s32.totalorder %s123, %s124
      %p133 = scmp.eq.s32.totalorder %s29, 0
      %p134 = por %p132, %p133
      %p135 = scmp.ne.s32.totalorder %s123, %s124
      %p136 = scmp.eq.s32.totalorder %s30, 1
      %p137 = por %p135, %p136
      %p139 = scmp.ne.s32.totalorder %s124, %s138
      %p140 = scmp.eq.s32.totalorder %s30, 0
      %p141 = por %p139, %p140
      %s143 = sadd.s32 %s142, 1
      %p146 = scmp.eq.s32.totalorder %s24, 1
      %p147 = scmp.ne.s32.totalorder %s142, %s144
      %p148 = scmp.eq.s32.totalorder %s24, 0
      %p149 = por %p147, %p148
      %p150 = scmp.ne.s32.totalorder %s142, %s144
      %p151 = scmp.eq.s32.totalorder %s29, 1
      %p152 = por %p150, %p151
      %p153 = scmp.ne.s32.totalorder %s144, %s145
      %p154 = scmp.eq.s32.totalorder %s29, 0
      %p155 = por %p153, %p154
      %p156 = scmp.ne.s32.totalorder %s144, %s145
      %p157 = scmp.eq.s32.totalorder %s30, 1
      %p158 = por %p156, %p157
      %p160 = scmp.ne.s32.totalorder %s145, %s159
      %p161 = scmp.eq.s32.totalorder %s30, 0
      %p162 = por %p160, %p161
      %s164 = sadd.s32 %s163, 1
      %p167 = scmp.eq.s32.totalorder %s24, 1
      %p168 = scmp.ne.s32.totalorder %s163, %s165
      %p169 = scmp.eq.s32.totalorder %s24, 0
      %p170 = por %p168, %p169
      %p171 = scmp.ne.s32.totalorder %s163, %s165
      %p172 = scmp.eq.s32.totalorder %s29, 1
      %p173 = por %p171, %p172
      %p174 = scmp.ne.s32.totalorder %s165, %s166
      %p175 = scmp.eq.s32.totalorder %s29, 0
      %p176 = por %p174, %p175
      %p177 = scmp.ne.s32.totalorder %s165, %s166
      %p178 = scmp.eq.s32.totalorder %s30, 1
      %p179 = por %p177, %p178
      %p181 = scmp.ne.s32.totalorder %s166, %s180
      %p182 = scmp.eq.s32.totalorder %s30, 0
      %p183 = por %p181, %p182
      %s185 = sadd.s32 %s184, 1
      %p188 = scmp.eq.s32.totalorder %s24, 1
      %p189 = scmp.ne.s32.totalorder %s184, %s186
      %p190 = scmp.eq.s32.totalorder %s24, 0
      %p191 = por %p189, %p190
      %p192 = scmp.ne.s32.totalorder %s184, %s186
      %p193 = scmp.eq.s32.totalorder %s29, 1
      %p194 = por %p192, %p193
      %p195 = scmp.ne.s32.totalorder %s186, %s187
      %p196 = scmp.eq.s32.totalorder %s29, 0
      %p197 = por %p195, %p196
      %p198 = scmp.ne.s32.totalorder %s186, %s187
      %p199 = scmp.eq.s32.totalorder %s30, 1
      %p200 = por %p198, %p199
      %p202 = scmp.ne.s32.totalorder %s187, %s201
      %p203 = scmp.eq.s32.totalorder %s30, 0
      %p204 = por %p202, %p203
      %s206 = sadd.s32 %s205, 1
      %p209 = scmp.eq.s32.totalorder %s24, 1
      %p210 = scmp.ne.s32.totalorder %s205, %s207
      %p211 = scmp.eq.s32.totalorder %s24, 0
      %p212 = por %p210, %p211
      %p213 = scmp.ne.s32.totalorder %s205, %s207
      %p214 = scmp.eq.s32.totalorder %s29, 1
      %p215 = por %p213, %p214
      %p216 = scmp.ne.s32.totalorder %s207, %s208
      %p217 = scmp.eq.s32.totalorder %s29, 0
      %p218 = por %p216, %p217
      %p219 = scmp.ne.s32.totalorder %s207, %s208
      %p220 = scmp.eq.s32.totalorder %s30, 1
      %p221 = por %p219, %p220
      %p223 = scmp.ne.s32.totalorder %s208, %s222
      %p224 = scmp.eq.s32.totalorder %s30, 0
      %p225 = por %p223, %p224
      %s227 = sadd.s32 %s226, 1
      %p230 = scmp.eq.s32.totalorder %s24, 1
      %p231 = scmp.ne.s32.totalorder %s226, %s228
      %p232 = scmp.eq.s32.totalorder %s24, 0
      %p233 = por %p231, %p232
      %p234 = scmp.ne.s32.totalorder %s226, %s228
      %p235 = scmp.eq.s32.totalorder %s29, 1
      %p236 = por %p234, %p235
      %p237 = scmp.ne.s32.totalorder %s228, %s229
      %p238 = scmp.eq.s32.totalorder %s29, 0
      %p239 = por %p237, %p238
      %p240 = scmp.ne.s32.totalorder %s228, %s229
      %p241 = scmp.eq.s32.totalorder %s30, 1
      %p242 = por %p240, %p241
      %p244 = scmp.ne.s32.totalorder %s229, %s243
      %p245 = scmp.eq.s32.totalorder %s30, 0
      %p246 = por %p244, %p245
      %s247 = ssub.s32 %s24, %s31
      %p248 = scmp.eq.s32.totalorder %s247, 0
      %s250 = sadd.s32 %s249, 1
      %s251 = scalar_select %p248, %s249, %s250
      %p254 = pneg %p248
      %p255 = scmp.eq.s32.totalorder %s24, 1
      %p256 = por %p254, %p255
      %p257 = scmp.ne.s32.totalorder %s249, %s252
      %p258 = scmp.eq.s32.totalorder %s24, 0
      %p259 = por %p257, %p258
      %p260 = scmp.ne.s32.totalorder %s249, %s252
      %p261 = scmp.eq.s32.totalorder %s29, 1
      %p262 = por %p260, %p261
      %p263 = scmp.ne.s32.totalorder %s252, %s253
      %p264 = scmp.eq.s32.totalorder %s29, 0
      %p265 = por %p263, %p264
      %p266 = scmp.ne.s32.totalorder %s252, %s253
      %p267 = scmp.eq.s32.totalorder %s30, 1
      %p268 = por %p266, %p267
      %p270 = scmp.ne.s32.totalorder %s253, %s269
      %p271 = scmp.eq.s32.totalorder %s30, 0
      %p272 = por %p270, %p271
      %p273 = scmp.le.s32.totalorder 1, %s24
      %p274 = scmp.lt.s32.totalorder %s24, 3
      %p275 = pnand %p273, %p274
      %p276 = pneg %p275
      // Predicated region
      $region9: #{tpu_custom_call.1} parent=5 // pred_check
        _
      $region10: #{tpu_custom_call.1} parent=5 // pred_check_branch
        %278 = sbr.rel (%p275) target = $region12
      $region11: #{tpu_custom_call.1} parent=5 // pred_region
        %s279 = ssub.s32 %s24, 1
        // Predicated region
        $region13: #{tpu_custom_call.1} parent=11 // pred_check
          %p280 = pneg %p71
        $region14: #{tpu_custom_call.1} parent=11 // pred_check_branch
          %282 = sbr.rel (%p280) target = $region16
        $region15: #{tpu_custom_call.1} parent=11 // pred_region
          %s284 = ssub.s32 256, 256
          %285 = vsyncadd [#allocation6], %s284
          %s286 = sshll.u32 [#allocation5], 4
          %s287 = int_to_ptr.vmem [resolvable:$true] %s286
          %292 = dma.hbm_to_vmem [thread:$0]  %s1, 256, %s287, [#allocation6], 128, 128, 8
        $region16: #{tpu_custom_call.1} parent=11 // pred_fallthru
          _
        // Predicated region
        $region17: #{tpu_custom_call.1} parent=11 // pred_check
          %p293 = pneg %p92
        $region18: #{tpu_custom_call.1} parent=11 // pred_check_branch
          %295 = sbr.rel (%p293) target = $region20
        $region19: #{tpu_custom_call.1} parent=11 // pred_region
          %s297 = ssub.s32 256, 256
          %298 = vsyncadd [#allocation6], %s297
          %s299 = sshll.u32 [#allocation7], 4
          %s300 = int_to_ptr.vmem [resolvable:$true] %s299
          %305 = dma.hbm_to_vmem [thread:$0]  %s2, 256, %s300, [#allocation6], 64, 64, 4
        $region20: #{tpu_custom_call.1} parent=11 // pred_fallthru
          _
        // Predicated region
        $region21: #{tpu_custom_call.1} parent=11 // pred_check
          %p306 = pneg %p113
        $region22: #{tpu_custom_call.1} parent=11 // pred_check_branch
          %308 = sbr.rel (%p306) target = $region24
        $region23: #{tpu_custom_call.1} parent=11 // pred_region
          _
        $region24: #{tpu_custom_call.1} parent=11 // pred_fallthru
          _
        // Predicated region
        $region25: #{tpu_custom_call.1} parent=11 // pred_check
          %p309 = pneg %p134
        $region26: #{tpu_custom_call.1} parent=11 // pred_check_branch
          %311 = sbr.rel (%p309) target = $region28
        $region27: #{tpu_custom_call.1} parent=11 // pred_region
          %s313 = ssub.s32 512, 512
          %314 = vsyncadd [#allocation9], %s313
          %s315 = sshll.u32 [#allocation8], 4
          %s316 = int_to_ptr.vmem [resolvable:$true] %s315
          %321 = dma.hbm_to_vmem [thread:$0]  %s4, 512, %s316, [#allocation9], 128, 128, 8
        $region28: #{tpu_custom_call.1} parent=11 // pred_fallthru
          _
        // Predicated region
        $region29: #{tpu_custom_call.1} parent=11 // pred_check
          %p322 = pneg %p155
        $region30: #{tpu_custom_call.1} parent=11 // pred_check_branch
          %324 = sbr.rel (%p322) target = $region32
        $region31: #{tpu_custom_call.1} parent=11 // pred_region
          _
        $region32: #{tpu_custom_call.1} parent=11 // pred_fallthru
          _
        // Predicated region
        $region33: #{tpu_custom_call.1} parent=11 // pred_check
          %p325 = pneg %p176
        $region34: #{tpu_custom_call.1} parent=11 // pred_check_branch
          %327 = sbr.rel (%p325) target = $region36
        $region35: #{tpu_custom_call.1} parent=11 // pred_region
          _
        $region36: #{tpu_custom_call.1} parent=11 // pred_fallthru
          _
        // Predicated region
        $region37: #{tpu_custom_call.1} parent=11 // pred_check
          %p328 = pneg %p197
        $region38: #{tpu_custom_call.1} parent=11 // pred_check_branch
          %330 = sbr.rel (%p328) target = $region40
        $region39: #{tpu_custom_call.1} parent=11 // pred_region
          _
        $region40: #{tpu_custom_call.1} parent=11 // pred_fallthru
          _
        // Predicated region
        $region41: #{tpu_custom_call.1} parent=11 // pred_check
          %p331 = pneg %p218
        $region42: #{tpu_custom_call.1} parent=11 // pred_check_branch
          %333 = sbr.rel (%p331) target = $region44
        $region43: #{tpu_custom_call.1} parent=11 // pred_region
          %s335 = ssub.s32 256, 256
          %336 = vsyncadd [#allocation9], %s335
          %s337 = sshll.u32 [#allocation10], 4
          %s338 = int_to_ptr.vmem [resolvable:$true] %s337
          %343 = dma.hbm_to_vmem [thread:$0]  %s8, 256, %s338, [#allocation9], 64, 64, 4
        $region44: #{tpu_custom_call.1} parent=11 // pred_fallthru
          _
        // Predicated region
        $region45: #{tpu_custom_call.1} parent=11 // pred_check
          %p344 = pneg %p239
        $region46: #{tpu_custom_call.1} parent=11 // pred_check_branch
          %346 = sbr.rel (%p344) target = $region48
        $region47: #{tpu_custom_call.1} parent=11 // pred_region
          _
        $region48: #{tpu_custom_call.1} parent=11 // pred_fallthru
          _
      $region12: #{tpu_custom_call.1} parent=5 // pred_fallthru
        _
      %p347 = scmp.lt.s32.totalorder %s24, 2
      // Predicated region
      $region49: #{tpu_custom_call.1} parent=5 // pred_check
        %p348 = pneg %p347
      $region50: #{tpu_custom_call.1} parent=5 // pred_check_branch
        %350 = sbr.rel (%p348) target = $region52
      $region51: #{tpu_custom_call.1} parent=5 // pred_region
        // Predicated region
        $region53: #{tpu_custom_call.1} parent=51 // pred_check
          %p351 = pneg %p44
        $region54: #{tpu_custom_call.1} parent=51 // pred_check_branch
          %353 = sbr.rel (%p351) target = $region56
        $region55: #{tpu_custom_call.1} parent=51 // pred_region
          %s354 = sand.u32 %s34, 1
          %s355 = scalar_lea.sflag [#allocation3], %s354
          %s356 = sand.u32 %s34, 1
          %s357 = smul.addr %s356, 8
          %s358 = scalar_lea.vmem [#allocation2], %s357
          %s360 = ssub.s32 128, 128
          %361 = vsyncadd %s355, %s360
          %s362 = smul.addr %s24, 128
          %s363 = scalar_lea.hbm %s0, %s362
          %s365 = sshll.u32 %s358, 4
          %s366 = int_to_ptr.vmem [resolvable:$true] %s365
          %368 = dma.hbm_to_vmem [thread:$0]  %s363, 128, %s366, %s355
        $region56: #{tpu_custom_call.1} parent=51 // pred_fallthru
          _
      $region52: #{tpu_custom_call.1} parent=5 // pred_fallthru
        _
      %p369 = scmp.le.s32.totalorder 1, %s24
      %p370 = scmp.lt.s32.totalorder %s24, 3
      %p371 = pnand %p369, %p370
      %p372 = pneg %p371
      // Predicated region
      $region57: #{tpu_custom_call.1} parent=5 // pred_check
        _
      $region58: #{tpu_custom_call.1} parent=5 // pred_check_branch
        %374 = sbr.rel (%p371) target = $region60
      $region59: #{tpu_custom_call.1} parent=5 // pred_region
        %s375 = ssub.s32 %s24, 1
        %s376 = sand.u32 %s37, 1
        %s377 = scalar_lea.sflag [#allocation3], %s376
        %s378 = sand.u32 %s37, 1
        %s379 = smul.addr %s378, 8
        %s380 = scalar_lea.vmem [#allocation2], %s379
        // Predicated region
        $region61: #{tpu_custom_call.1} parent=59 // pred_check
          %p381 = pneg %p50
        $region62: #{tpu_custom_call.1} parent=59 // pred_check_branch
          %383 = sbr.rel (%p381) target = $region64
        $region63: #{tpu_custom_call.1} parent=59 // pred_region
          %384 = dma.done %s377, 128
        $region64: #{tpu_custom_call.1} parent=59 // pred_fallthru
          _
        // Predicated region
        $region65: #{tpu_custom_call.1} parent=59 // pred_check
          %p385 = pneg %p71
        $region66: #{tpu_custom_call.1} parent=59 // pred_check_branch
          %387 = sbr.rel (%p385) target = $region68
        $region67: #{tpu_custom_call.1} parent=59 // pred_region
          %388 = dma.done [#allocation6], 256
        $region68: #{tpu_custom_call.1} parent=59 // pred_fallthru
          _
        // Predicated region
        $region69: #{tpu_custom_call.1} parent=59 // pred_check
          %p389 = pneg %p92
        $region70: #{tpu_custom_call.1} parent=59 // pred_check_branch
          %391 = sbr.rel (%p389) target = $region72
        $region71: #{tpu_custom_call.1} parent=59 // pred_region
          %392 = dma.done [#allocation6], 256
        $region72: #{tpu_custom_call.1} parent=59 // pred_fallthru
          _
        // Predicated region
        $region73: #{tpu_custom_call.1} parent=59 // pred_check
          %p393 = pneg %p134
        $region74: #{tpu_custom_call.1} parent=59 // pred_check_branch
          %395 = sbr.rel (%p393) target = $region76
        $region75: #{tpu_custom_call.1} parent=59 // pred_region
          %396 = dma.done [#allocation9], 512
        $region76: #{tpu_custom_call.1} parent=59 // pred_fallthru
          _
        // Predicated region
        $region77: #{tpu_custom_call.1} parent=59 // pred_check
          %p397 = pneg %p218
        $region78: #{tpu_custom_call.1} parent=59 // pred_check_branch
          %399 = sbr.rel (%p397) target = $region80
        $region79: #{tpu_custom_call.1} parent=59 // pred_region
          %400 = dma.done [#allocation9], 256
        $region80: #{tpu_custom_call.1} parent=59 // pred_fallthru
          _
        %s401 = sand.u32 %s37, 1
        %s402 = scalar_lea.sflag [#allocation3], %s401
        %s403 = sand.u32 %s37, 1
        %s404 = smul.addr %s403, 8
        %s405 = scalar_lea.vmem [#allocation2], %s404
        %p406 = pneg %p50
        %p407 = pneg %p47
        %p408 = pneg %p71
        %p409 = pneg %p68
        %p410 = pneg %p92
        %p411 = pneg %p89
        %p412 = pneg %p113
        %p413 = pneg %p110
        %p414 = pneg %p134
        %p415 = pneg %p131
        %p416 = pneg %p155
        %p417 = pneg %p152
        %p418 = pneg %p176
        %p419 = pneg %p173
        %p420 = pneg %p197
        %p421 = pneg %p194
        %p422 = pneg %p218
        %p423 = pneg %p215
        %p424 = pneg %p239
        %p425 = pneg %p236
        %p426 = pneg %p265
        %p427 = pneg %p262
        %s428 = sand.u32 %s252, 1
        %s429 = scalar_lea.sflag [#allocation4], %s428
        %s430 = sand.u32 %s252, 1
        %s431 = smul.addr %s430, 8
        %s432 = scalar_lea.vmem [#allocation11], %s431
        %v434 = vld [vmem:[%s380] sm:$0xff]
        %v435 = vld [vmem:[#allocation5] sm:$0xff]
        %v436 = vld [vmem:[#allocation5 + $0x8] sm:$0xff]
        %vm437 = vcmask 261120
        %v438 = vsel %vm437, %v434, 0.0
        %439 = vadd.xlane.f32.xlu0 %v438
        %v440 = vpop.xlane.xlu0 %439
        %v441 = vrcp.pop 32.0
        %v442 = vmul.f32 %v440, %v441
        %v443 = vsub.f32 %v434, %v442
        %v444 = vmul.f32 %v443, %v443
        %v445 = vsel %vm437, %v444, 0.0
        %446 = vadd.xlane.f32.xlu0 %v445
        %v447 = vpop.xlane.xlu0 %446
        %v448 = vmul.f32 %v447, %v441
        %v449 = vadd.f32 %v448, 1e-05
        %v450 = vrsqrt.pop %v449
        %v451 = vmul.f32 %v443, %v450
        %v452 = vsel %vm437, %v435, 0.0
        %453 = vadd.xlane.f32.xlu0 %v452
        %v454 = vpop.xlane.xlu0 %453
        %v455 = vsel %vm437, %v436, 0.0
        %456 = vadd.xlane.f32.xlu0 %v455
        %v457 = vpop.xlane.xlu0 %456
        %v458 = vmul.f32 %v454, %v441
        %v459 = vmul.f32 %v457, %v441
        %v460 = vsub.f32 %v435, %v458
        %v461 = vsub.f32 %v436, %v459
        %v462 = vmul.f32 %v460, %v460
        %v463 = vmul.f32 %v461, %v461
        %v464 = vsel %vm437, %v462, 0.0
        %465 = vadd.xlane.f32.xlu0 %v464
        %v466 = vpop.xlane.xlu0 %465
        %v467 = vsel %vm437, %v463, 0.0
        %468 = vadd.xlane.f32.xlu0 %v467
        %v469 = vpop.xlane.xlu0 %468
        %v470 = vmul.f32 %v466, %v441
        %v471 = vmul.f32 %v469, %v441
        %v472 = vadd.f32 %v470, 1e-05
        %v473 = vadd.f32 %v471, 1e-05
        %v474 = vrsqrt.pop %v472
        %v475 = vrsqrt.pop %v473
        %v476 = vmul.f32 %v460, %v474
        %v477 = vmul.f32 %v461, %v475
        %v478 = vpack.c.bf16 %v451, %v451
        %v479 = vld [vmem:[#allocation7] sm:$0xf]
        %v480 = vld [vmem:[#allocation7 + $0x4] sm:$0xf]
        %v481 = vld [vmem:[#allocation7 + $0x8] sm:$0xf]
        %v482 = vld [vmem:[#allocation7 + $0xc] sm:$0xf]
        %v483 = vld [vmem:[%s3] sm:$0x1]
        %v485 = vlaneseq
        %v486 = vshrl.u32 %v485, 7
        %v487 = vsub.s32 0, %v486
        %v488 = vrot.slane %v483, %v487
        %v494 = vunpack.c.l.b16 %v479
        %v495 = vunpack.c.l.b16 %v480
        %v496 = vunpack.c.l.b16 %v481
        %v497 = vunpack.c.l.b16 %v482
        %v498 = vpack.c.b16 %v495, %v494
        %v499 = vpack.c.b16 %v497, %v496
        %v503 = vsel %vm437, %v478, 0
        %505 = vmatprep.subr.bf16.mxu0 0
        %506 = vmatpush1.bf16.msra.mxu0 %v498
        %507 = vmatprep.subr.bf16.mxu0 0
        %508 = vmatpush1.bf16.msra.mxu0 %v499
        %509 = vmatprep.subr.bf16.mxu0 0
        %510 = vmatpush1.bf16.msra.mxu0 0
        %511 = vmatprep.subr.bf16.mxu0 0
        %512 = vmatpush1.bf16.msra.mxu0 0
        %513 = vmatprep.subr.bf16.mxu0 0
        %514 = vmatpush1.bf16.msra.mxu0 0
        %515 = vmatprep.subr.bf16.mxu0 0
        %516 = vmatpush1.bf16.msra.mxu0 0
        %517 = vmatprep.subr.bf16.mxu0 0
        %518 = vmatpush1.bf16.msra.mxu0 0
        %519 = vmatprep.subr.bf16.mxu0 0
        %520 = vmatpush1.bf16.msra.mxu0 0
        %521 = vmatprep.subr.bf16.mxu0 0
        %522 = vmatpush1.bf16.msra.mxu0 0
        %523 = vmatprep.subr.bf16.mxu0 0
        %524 = vmatpush1.bf16.msra.mxu0 0
        %525 = vmatprep.subr.bf16.mxu0 0
        %526 = vmatpush1.bf16.msra.mxu0 0
        %527 = vmatprep.subr.bf16.mxu0 0
        %528 = vmatpush1.bf16.msra.mxu0 0
        %529 = vmatprep.subr.bf16.mxu0 0
        %530 = vmatpush1.bf16.msra.mxu0 0
        %531 = vmatprep.subr.bf16.mxu0 0
        %532 = vmatpush1.bf16.msra.mxu0 0
        %533 = vmatprep.subr.bf16.mxu0 0
        %534 = vmatpush1.bf16.msra.mxu0 0
        %535 = vmatprep.subr.bf16.mxu0 0
        %536 = vmatpush1.bf16.msra.mxu0 0
        %537 = vmatprep.mubr.bf16.mxu0 0
        %538 = vmatmul.mubr.bf16.gmra.mrb[0].mxu0 %v503
        %v539 = vpop.f32.mrb[0].mxu0
        %v540 = vadd.f32 %v488, %v539
        %v541 = vpop.f32.mrb[0].mxu0
        %v542 = vpop.f32.mrb[0].mxu0
        %v543 = vpop.f32.mrb[0].mxu0
        %544 = vdwg.mxu0
        %v545 = vpack.c.bf16 %v477, %v476
        %v546 = vld [vmem:[#allocation8] sm:$0xff]
        %v547 = vld [vmem:[#allocation8 + $0x8] sm:$0xff]
        %v548 = vld [vmem:[#allocation8 + $0x10] sm:$0xff]
        %v549 = vld [vmem:[#allocation8 + $0x18] sm:$0xff]
        %v550 = vld [vmem:[%s5] sm:$0x3]
        %v552 = vlaneseq
        %v553 = vshrl.u32 %v552, 7
        %v554 = vsub.s32 0, %v553
        %v555 = vrot.slane %v550, %v554
        %v556 = vlaneseq
        %v557 = vshrl.u32 %v556, 7
        %v558 = vsub.s32 1, %v557
        %v559 = vrot.slane %v550, %v558
        %v566 = vunpack.c.l.b16 %v546
        %v567 = vunpack.c.h.b16 %v546
        %v568 = vunpack.c.l.b16 %v547
        %v569 = vunpack.c.h.b16 %v547
        %v570 = vunpack.c.l.b16 %v548
        %v571 = vunpack.c.h.b16 %v548
        %v572 = vunpack.c.l.b16 %v549
        %v573 = vunpack.c.h.b16 %v549
        %v574 = vpack.c.b16 %v568, %v566
        %v575 = vpack.c.b16 %v569, %v567
        %v576 = vpack.c.b16 %v572, %v570
        %v577 = vpack.c.b16 %v573, %v571
        %v583 = vsel %vm437, %v545, 0
        %585 = vmatprep.subr.bf16.mxu0 %v575
        %586 = vmatpush1.bf16.msra.mxu0 %v574
        %587 = vmatprep.subr.bf16.mxu0 %v577
        %588 = vmatpush1.bf16.msra.mxu0 %v576
        %589 = vmatprep.subr.bf16.mxu0 0
        %590 = vmatpush1.bf16.msra.mxu0 0
        %591 = vmatprep.subr.bf16.mxu0 0
        %592 = vmatpush1.bf16.msra.mxu0 0
        %593 = vmatprep.subr.bf16.mxu0 0
        %594 = vmatpush1.bf16.msra.mxu0 0
        %595 = vmatprep.subr.bf16.mxu0 0
        %596 = vmatpush1.bf16.msra.mxu0 0
        %597 = vmatprep.subr.bf16.mxu0 0
        %598 = vmatpush1.bf16.msra.mxu0 0
        %599 = vmatprep.subr.bf16.mxu0 0
        %600 = vmatpush1.bf16.msra.mxu0 0
        %601 = vmatprep.subr.bf16.mxu0 0
        %602 = vmatpush1.bf16.msra.mxu0 0
        %603 = vmatprep.subr.bf16.mxu0 0
        %604 = vmatpush1.bf16.msra.mxu0 0
        %605 = vmatprep.subr.bf16.mxu0 0
        %606 = vmatpush1.bf16.msra.mxu0 0
        %607 = vmatprep.subr.bf16.mxu0 0
        %608 = vmatpush1.bf16.msra.mxu0 0
        %609 = vmatprep.subr.bf16.mxu0 0
        %610 = vmatpush1.bf16.msra.mxu0 0
        %611 = vmatprep.subr.bf16.mxu0 0
        %612 = vmatpush1.bf16.msra.mxu0 0
        %613 = vmatprep.subr.bf16.mxu0 0
        %614 = vmatpush1.bf16.msra.mxu0 0
        %615 = vmatprep.subr.bf16.mxu0 0
        %616 = vmatpush1.bf16.msra.mxu0 0
        %617 = vmatprep.mubr.bf16.mxu0 0
        %618 = vmatmul.mubr.bf16.gmra.mrb[0].mxu0 %v583
        %v619 = vpop.f32.mrb[0].mxu0
        %v620 = vadd.f32 %v555, %v619
        %v621 = vpop.f32.mrb[0].mxu0
        %v622 = vadd.f32 %v559, %v621
        %v623 = vpop.f32.mrb[0].mxu0
        %v624 = vadd.f32 %v555, %v623
        %v625 = vpop.f32.mrb[0].mxu0
        %v626 = vadd.f32 %v559, %v625
        %627 = vdwg.mxu0
        %v628 = vpack.c.bf16 %v540, %v540
        %v629 = vpack.c.bf16 %v624, %v620
        %v630 = vpack.c.bf16 %v626, %v622
        %v632 = vsel %vm437, %v628, 0
        %v635 = vsel %vm437, %v629, 0
        %637 = vmatprep.subr.bf16.mxu0 0
        %638 = vmatpush1.bf16.xpose.msra.mxu0 %v635
        %639 = vmatprep.subr.bf16.mxu0 0
        %640 = vmatpush1.bf16.xpose.msra.mxu0 0
        %641 = vmatprep.subr.bf16.mxu0 0
        %642 = vmatpush1.bf16.xpose.msra.mxu0 0
        %643 = vmatprep.subr.bf16.mxu0 0
        %644 = vmatpush1.bf16.xpose.msra.mxu0 0
        %645 = vmatprep.subr.bf16.mxu0 0
        %646 = vmatpush1.bf16.xpose.msra.mxu0 0
        %647 = vmatprep.subr.bf16.mxu0 0
        %648 = vmatpush1.bf16.xpose.msra.mxu0 0
        %649 = vmatprep.subr.bf16.mxu0 0
        %650 = vmatpush1.bf16.xpose.msra.mxu0 0
        %651 = vmatprep.subr.bf16.mxu0 0
        %652 = vmatpush1.bf16.xpose.msra.mxu0 0
        %653 = vmatprep.subr.bf16.mxu0 0
        %654 = vmatpush1.bf16.xpose.msra.mxu0 0
        %655 = vmatprep.subr.bf16.mxu0 0
        %656 = vmatpush1.bf16.xpose.msra.mxu0 0
        %657 = vmatprep.subr.bf16.mxu0 0
        %658 = vmatpush1.bf16.xpose.msra.mxu0 0
        %659 = vmatprep.subr.bf16.mxu0 0
        %660 = vmatpush1.bf16.xpose.msra.mxu0 0
        %661 = vmatprep.subr.bf16.mxu0 0
        %662 = vmatpush1.bf16.xpose.msra.mxu0 0
        %663 = vmatprep.subr.bf16.mxu0 0
        %664 = vmatpush1.bf16.xpose.msra.mxu0 0
        %665 = vmatprep.subr.bf16.mxu0 0
        %666 = vmatpush1.bf16.xpose.msra.mxu0 0
        %667 = vmatprep.subr.bf16.mxu0 0
        %668 = vmatpush1.bf16.xpose.msra.mxu0 0
        %669 = vmatprep.mubr.bf16.mxu0 0
        %670 = vmatmul.mubr.bf16.gmra.mrb[0].mxu0 %v632
        %v671 = vpop.f32.mrb[0].mxu0
        %v672 = vadd.f32 0.0, %v671
        %v673 = vpop.f32.mrb[0].mxu0
        %v674 = vpop.f32.mrb[0].mxu0
        %v675 = vpop.f32.mrb[0].mxu0
        %676 = vdwg.mxu0
        %vm677 = vcmask 130048
        %v678 = vsel %vm677, %v672, -inf
        %679 = vmax.xlane.f32.xlu0 %v678
        %v680 = vpop.xlane.xlu0 %679
        %v681 = vsub.f32 %v672, %v680
        %v682 = vmul.f32 %v681, 1.442695
        %v683 = vpow.pop %v682
        %v684 = vsel %vm677, %v683, 0.0
        %685 = vadd.xlane.f32.xlu0 %v684
        %v686 = vpop.xlane.xlu0 %685
        %v687 = vrcp.pop %v686
        %v688 = vmul.f32 %v683, %v687
        %v689 = vpack.c.bf16 %v688, %v688
        %691 = vrot.lane.b32.xlu0 %v628, 96
        %v692 = vpop.permute.xlu0 %691
        %694 = vrot.lane.b32.xlu0 %v629, 96
        %v695 = vpop.permute.xlu0 %694
        %v697 = vsel %vm437, %v692, 0
        %v700 = vsel %vm437, %v695, 0
        %702 = vmatprep.subr.bf16.mxu0 0
        %703 = vmatpush1.bf16.xpose.msra.mxu0 %v700
        %704 = vmatprep.subr.bf16.mxu0 0
        %705 = vmatpush1.bf16.xpose.msra.mxu0 0
        %706 = vmatprep.subr.bf16.mxu0 0
        %707 = vmatpush1.bf16.xpose.msra.mxu0 0
        %708 = vmatprep.subr.bf16.mxu0 0
        %709 = vmatpush1.bf16.xpose.msra.mxu0 0
        %710 = vmatprep.subr.bf16.mxu0 0
        %711 = vmatpush1.bf16.xpose.msra.mxu0 0
        %712 = vmatprep.subr.bf16.mxu0 0
        %713 = vmatpush1.bf16.xpose.msra.mxu0 0
        %714 = vmatprep.subr.bf16.mxu0 0
        %715 = vmatpush1.bf16.xpose.msra.mxu0 0
        %716 = vmatprep.subr.bf16.mxu0 0
        %717 = vmatpush1.bf16.xpose.msra.mxu0 0
        %718 = vmatprep.subr.bf16.mxu0 0
        %719 = vmatpush1.bf16.xpose.msra.mxu0 0
        %720 = vmatprep.subr.bf16.mxu0 0
        %721 = vmatpush1.bf16.xpose.msra.mxu0 0
        %722 = vmatprep.subr.bf16.mxu0 0
        %723 = vmatpush1.bf16.xpose.msra.mxu0 0
        %724 = vmatprep.subr.bf16.mxu0 0
        %725 = vmatpush1.bf16.xpose.msra.mxu0 0
        %726 = vmatprep.subr.bf16.mxu0 0
        %727 = vmatpush1.bf16.xpose.msra.mxu0 0
        %728 = vmatprep.subr.bf16.mxu0 0
        %729 = vmatpush1.bf16.xpose.msra.mxu0 0
        %730 = vmatprep.subr.bf16.mxu0 0
        %731 = vmatpush1.bf16.xpose.msra.mxu0 0
        %732 = vmatprep.subr.bf16.mxu0 0
        %733 = vmatpush1.bf16.xpose.msra.mxu0 0
        %734 = vmatprep.mubr.bf16.mxu0 0
        %735 = vmatmul.mubr.bf16.gmra.mrb[0].mxu0 %v697
        %v736 = vpop.f32.mrb[0].mxu0
        %v737 = vadd.f32 0.0, %v736
        %v738 = vpop.f32.mrb[0].mxu0
        %v739 = vpop.f32.mrb[0].mxu0
        %v740 = vpop.f32.mrb[0].mxu0
        %741 = vdwg.mxu0
        %v742 = vsel %vm677, %v737, -inf
        %743 = vmax.xlane.f32.xlu0 %v742
        %v744 = vpop.xlane.xlu0 %743
        %v745 = vsub.f32 %v737, %v744
        %v746 = vmul.f32 %v745, 1.442695
        %v747 = vpow.pop %v746
        %v748 = vsel %vm677, %v747, 0.0
        %749 = vadd.xlane.f32.xlu0 %v748
        %v750 = vpop.xlane.xlu0 %749
        %v751 = vrcp.pop %v750
        %v752 = vmul.f32 %v747, %v751
        %v753 = vpack.c.bf16 %v752, %v752
        %755 = vrot.lane.b32.xlu0 %v630, 96
        %v756 = vpop.permute.xlu0 %755
        %v759 = vsel %vm677, %v753, 0
        %761 = vmatprep.subr.bf16.mxu0 0
        %762 = vmatpush1.bf16.msra.mxu0 %v756
        %763 = vmatprep.subr.bf16.mxu0 0
        %764 = vmatpush1.bf16.msra.mxu0 0
        %765 = vmatprep.subr.bf16.mxu0 0
        %766 = vmatpush1.bf16.msra.mxu0 0
        %767 = vmatprep.subr.bf16.mxu0 0
        %768 = vmatpush1.bf16.msra.mxu0 0
        %769 = vmatprep.subr.bf16.mxu0 0
        %770 = vmatpush1.bf16.msra.mxu0 0
        %771 = vmatprep.subr.bf16.mxu0 0
        %772 = vmatpush1.bf16.msra.mxu0 0
        %773 = vmatprep.subr.bf16.mxu0 0
        %774 = vmatpush1.bf16.msra.mxu0 0
        %775 = vmatprep.subr.bf16.mxu0 0
        %776 = vmatpush1.bf16.msra.mxu0 0
        %777 = vmatprep.subr.bf16.mxu0 0
        %778 = vmatpush1.bf16.msra.mxu0 0
        %779 = vmatprep.subr.bf16.mxu0 0
        %780 = vmatpush1.bf16.msra.mxu0 0
        %781 = vmatprep.subr.bf16.mxu0 0
        %782 = vmatpush1.bf16.msra.mxu0 0
        %783 = vmatprep.subr.bf16.mxu0 0
        %784 = vmatpush1.bf16.msra.mxu0 0
        %785 = vmatprep.subr.bf16.mxu0 0
        %786 = vmatpush1.bf16.msra.mxu0 0
        %787 = vmatprep.subr.bf16.mxu0 0
        %788 = vmatpush1.bf16.msra.mxu0 0
        %789 = vmatprep.subr.bf16.mxu0 0
        %790 = vmatpush1.bf16.msra.mxu0 0
        %791 = vmatprep.subr.bf16.mxu0 0
        %792 = vmatpush1.bf16.msra.mxu0 0
        %793 = vmatprep.mubr.bf16.mxu0 0
        %794 = vmatmul.mubr.bf16.gmra.mrb[0].mxu0 %v759
        %v795 = vpop.f32.mrb[0].mxu0
        %v796 = vadd.f32 0.0, %v795
        %v797 = vpop.f32.mrb[0].mxu0
        %v798 = vpop.f32.mrb[0].mxu0
        %v799 = vpop.f32.mrb[0].mxu0
        %800 = vdwg.mxu0
        %v802 = vsel %vm677, %v689, 0
        %804 = vmatprep.subr.bf16.mxu0 0
        %805 = vmatpush1.bf16.msra.mxu0 %v630
        %806 = vmatprep.subr.bf16.mxu0 0
        %807 = vmatpush1.bf16.msra.mxu0 0
        %808 = vmatprep.subr.bf16.mxu0 0
        %809 = vmatpush1.bf16.msra.mxu0 0
        %810 = vmatprep.subr.bf16.mxu0 0
        %811 = vmatpush1.bf16.msra.mxu0 0
        %812 = vmatprep.subr.bf16.mxu0 0
        %813 = vmatpush1.bf16.msra.mxu0 0
        %814 = vmatprep.subr.bf16.mxu0 0
        %815 = vmatpush1.bf16.msra.mxu0 0
        %816 = vmatprep.subr.bf16.mxu0 0
        %817 = vmatpush1.bf16.msra.mxu0 0
        %818 = vmatprep.subr.bf16.mxu0 0
        %819 = vmatpush1.bf16.msra.mxu0 0
        %820 = vmatprep.subr.bf16.mxu0 0
        %821 = vmatpush1.bf16.msra.mxu0 0
        %822 = vmatprep.subr.bf16.mxu0 0
        %823 = vmatpush1.bf16.msra.mxu0 0
        %824 = vmatprep.subr.bf16.mxu0 0
        %825 = vmatpush1.bf16.msra.mxu0 0
        %826 = vmatprep.subr.bf16.mxu0 0
        %827 = vmatpush1.bf16.msra.mxu0 0
        %828 = vmatprep.subr.bf16.mxu0 0
        %829 = vmatpush1.bf16.msra.mxu0 0
        %830 = vmatprep.subr.bf16.mxu0 0
        %831 = vmatpush1.bf16.msra.mxu0 0
        %832 = vmatprep.subr.bf16.mxu0 0
        %833 = vmatpush1.bf16.msra.mxu0 0
        %834 = vmatprep.subr.bf16.mxu0 0
        %835 = vmatpush1.bf16.msra.mxu0 0
        %836 = vmatprep.mubr.bf16.mxu0 0
        %837 = vmatmul.mubr.bf16.gmra.mrb[0].mxu0 %v802
        %v838 = vpop.f32.mrb[0].mxu0
        %v839 = vadd.f32 %v796, %v838
        %v840 = vpop.f32.mrb[0].mxu0
        %v841 = vpop.f32.mrb[0].mxu0
        %v842 = vpop.f32.mrb[0].mxu0
        %843 = vdwg.mxu0
        %844 = vrot.lane.b32.xlu0 %v628, 64
        %v845 = vpop.permute.xlu0 %844
        %846 = vrot.lane.b32.xlu0 %v629, 64
        %v847 = vpop.permute.xlu0 %846
        %v849 = vsel %vm437, %v845, 0
        %v852 = vsel %vm437, %v847, 0
        %854 = vmatprep.subr.bf16.mxu0 0
        %855 = vmatpush1.bf16.xpose.msra.mxu0 %v852
        %856 = vmatprep.subr.bf16.mxu0 0
        %857 = vmatpush1.bf16.xpose.msra.mxu0 0
        %858 = vmatprep.subr.bf16.mxu0 0
        %859 = vmatpush1.bf16.xpose.msra.mxu0 0
        %860 = vmatprep.subr.bf16.mxu0 0
        %861 = vmatpush1.bf16.xpose.msra.mxu0 0
        %862 = vmatprep.subr.bf16.mxu0 0
        %863 = vmatpush1.bf16.xpose.msra.mxu0 0
        %864 = vmatprep.subr.bf16.mxu0 0
        %865 = vmatpush1.bf16.xpose.msra.mxu0 0
        %866 = vmatprep.subr.bf16.mxu0 0
        %867 = vmatpush1.bf16.xpose.msra.mxu0 0
        %868 = vmatprep.subr.bf16.mxu0 0
        %869 = vmatpush1.bf16.xpose.msra.mxu0 0
        %870 = vmatprep.subr.bf16.mxu0 0
        %871 = vmatpush1.bf16.xpose.msra.mxu0 0
        %872 = vmatprep.subr.bf16.mxu0 0
        %873 = vmatpush1.bf16.xpose.msra.mxu0 0
        %874 = vmatprep.subr.bf16.mxu0 0
        %875 = vmatpush1.bf16.xpose.msra.mxu0 0
        %876 = vmatprep.subr.bf16.mxu0 0
        %877 = vmatpush1.bf16.xpose.msra.mxu0 0
        %878 = vmatprep.subr.bf16.mxu0 0
        %879 = vmatpush1.bf16.xpose.msra.mxu0 0
        %880 = vmatprep.subr.bf16.mxu0 0
        %881 = vmatpush1.bf16.xpose.msra.mxu0 0
        %882 = vmatprep.subr.bf16.mxu0 0
        %883 = vmatpush1.bf16.xpose.msra.mxu0 0
        %884 = vmatprep.subr.bf16.mxu0 0
        %885 = vmatpush1.bf16.xpose.msra.mxu0 0
        %886 = vmatprep.mubr.bf16.mxu0 0
        %887 = vmatmul.mubr.bf16.gmra.mrb[0].mxu0 %v849
        %v888 = vpop.f32.mrb[0].mxu0
        %v889 = vadd.f32 0.0, %v888
        %v890 = vpop.f32.mrb[0].mxu0
        %v891 = vpop.f32.mrb[0].mxu0
        %v892 = vpop.f32.mrb[0].mxu0
        %893 = vdwg.mxu0
        %v894 = vsel %vm677, %v889, -inf
        %895 = vmax.xlane.f32.xlu0 %v894
        %v896 = vpop.xlane.xlu0 %895
        %v897 = vsub.f32 %v889, %v896
        %v898 = vmul.f32 %v897, 1.442695
        %v899 = vpow.pop %v898
        %v900 = vsel %vm677, %v899, 0.0
        %901 = vadd.xlane.f32.xlu0 %v900
        %v902 = vpop.xlane.xlu0 %901
        %v903 = vrcp.pop %v902
        %v904 = vmul.f32 %v899, %v903
        %v905 = vpack.c.bf16 %v904, %v904
        %906 = vrot.lane.b32.xlu0 %v630, 64
        %v907 = vpop.permute.xlu0 %906
        %v910 = vsel %vm677, %v905, 0
        %912 = vmatprep.subr.bf16.mxu0 0
        %913 = vmatpush1.bf16.msra.mxu0 %v907
        %914 = vmatprep.subr.bf16.mxu0 0
        %915 = vmatpush1.bf16.msra.mxu0 0
        %916 = vmatprep.subr.bf16.mxu0 0
        %917 = vmatpush1.bf16.msra.mxu0 0
        %918 = vmatprep.subr.bf16.mxu0 0
        %919 = vmatpush1.bf16.msra.mxu0 0
        %920 = vmatprep.subr.bf16.mxu0 0
        %921 = vmatpush1.bf16.msra.mxu0 0
        %922 = vmatprep.subr.bf16.mxu0 0
        %923 = vmatpush1.bf16.msra.mxu0 0
        %924 = vmatprep.subr.bf16.mxu0 0
        %925 = vmatpush1.bf16.msra.mxu0 0
        %926 = vmatprep.subr.bf16.mxu0 0
        %927 = vmatpush1.bf16.msra.mxu0 0
        %928 = vmatprep.subr.bf16.mxu0 0
        %929 = vmatpush1.bf16.msra.mxu0 0
        %930 = vmatprep.subr.bf16.mxu0 0
        %931 = vmatpush1.bf16.msra.mxu0 0
        %932 = vmatprep.subr.bf16.mxu0 0
        %933 = vmatpush1.bf16.msra.mxu0 0
        %934 = vmatprep.subr.bf16.mxu0 0
        %935 = vmatpush1.bf16.msra.mxu0 0
        %936 = vmatprep.subr.bf16.mxu0 0
        %937 = vmatpush1.bf16.msra.mxu0 0
        %938 = vmatprep.subr.bf16.mxu0 0
        %939 = vmatpush1.bf16.msra.mxu0 0
        %940 = vmatprep.subr.bf16.mxu0 0
        %941 = vmatpush1.bf16.msra.mxu0 0
        %942 = vmatprep.subr.bf16.mxu0 0
        %943 = vmatpush1.bf16.msra.mxu0 0
        %944 = vmatprep.mubr.bf16.mxu0 0
        %945 = vmatmul.mubr.bf16.gmra.mrb[0].mxu0 %v910
        %v946 = vpop.f32.mrb[0].mxu0
        %v947 = vadd.f32 0.0, %v946
        %v948 = vpop.f32.mrb[0].mxu0
        %v949 = vpop.f32.mrb[0].mxu0
        %v950 = vpop.f32.mrb[0].mxu0
        %951 = vdwg.mxu0
        %v952 = vadd.f32 %v839, %v947
        %953 = vrot.lane.b32.xlu0 %v628, 32
        %v954 = vpop.permute.xlu0 %953
        %955 = vrot.lane.b32.xlu0 %v629, 32
        %v956 = vpop.permute.xlu0 %955
        %v958 = vsel %vm437, %v954, 0
        %v961 = vsel %vm437, %v956, 0
        %963 = vmatprep.subr.bf16.mxu0 0
        %964 = vmatpush1.bf16.xpose.msra.mxu0 %v961
        %965 = vmatprep.subr.bf16.mxu0 0
        %966 = vmatpush1.bf16.xpose.msra.mxu0 0
        %967 = vmatprep.subr.bf16.mxu0 0
        %968 = vmatpush1.bf16.xpose.msra.mxu0 0
        %969 = vmatprep.subr.bf16.mxu0 0
        %970 = vmatpush1.bf16.xpose.msra.mxu0 0
        %971 = vmatprep.subr.bf16.mxu0 0
        %972 = vmatpush1.bf16.xpose.msra.mxu0 0
        %973 = vmatprep.subr.bf16.mxu0 0
        %974 = vmatpush1.bf16.xpose.msra.mxu0 0
        %975 = vmatprep.subr.bf16.mxu0 0
        %976 = vmatpush1.bf16.xpose.msra.mxu0 0
        %977 = vmatprep.subr.bf16.mxu0 0
        %978 = vmatpush1.bf16.xpose.msra.mxu0 0
        %979 = vmatprep.subr.bf16.mxu0 0
        %980 = vmatpush1.bf16.xpose.msra.mxu0 0
        %981 = vmatprep.subr.bf16.mxu0 0
        %982 = vmatpush1.bf16.xpose.msra.mxu0 0
        %983 = vmatprep.subr.bf16.mxu0 0
        %984 = vmatpush1.bf16.xpose.msra.mxu0 0
        %985 = vmatprep.subr.bf16.mxu0 0
        %986 = vmatpush1.bf16.xpose.msra.mxu0 0
        %987 = vmatprep.subr.bf16.mxu0 0
        %988 = vmatpush1.bf16.xpose.msra.mxu0 0
        %989 = vmatprep.subr.bf16.mxu0 0
        %990 = vmatpush1.bf16.xpose.msra.mxu0 0
        %991 = vmatprep.subr.bf16.mxu0 0
        %992 = vmatpush1.bf16.xpose.msra.mxu0 0
        %993 = vmatprep.subr.bf16.mxu0 0
        %994 = vmatpush1.bf16.xpose.msra.mxu0 0
        %995 = vmatprep.mubr.bf16.mxu0 0
        %996 = vmatmul.mubr.bf16.gmra.mrb[0].mxu0 %v958
        %v997 = vpop.f32.mrb[0].mxu0
        %v998 = vadd.f32 0.0, %v997
        %v999 = vpop.f32.mrb[0].mxu0
        %v1000 = vpop.f32.mrb[0].mxu0
        %v1001 = vpop.f32.mrb[0].mxu0
        %1002 = vdwg.mxu0
        %v1003 = vsel %vm677, %v998, -inf
        %1004 = vmax.xlane.f32.xlu0 %v1003
        %v1005 = vpop.xlane.xlu0 %1004
        %v1006 = vsub.f32 %v998, %v1005
        %v1007 = vmul.f32 %v1006, 1.442695
        %v1008 = vpow.pop %v1007
        %v1009 = vsel %vm677, %v1008, 0.0
        %1010 = vadd.xlane.f32.xlu0 %v1009
        %v1011 = vpop.xlane.xlu0 %1010
        %v1012 = vrcp.pop %v1011
        %v1013 = vmul.f32 %v1008, %v1012
        %v1014 = vpack.c.bf16 %v1013, %v1013
        %1015 = vrot.lane.b32.xlu0 %v630, 32
        %v1016 = vpop.permute.xlu0 %1015
        %v1019 = vsel %vm677, %v1014, 0
        %1021 = vmatprep.subr.bf16.mxu0 0
        %1022 = vmatpush1.bf16.msra.mxu0 %v1016
        %1023 = vmatprep.subr.bf16.mxu0 0
        %1024 = vmatpush1.bf16.msra.mxu0 0
        %1025 = vmatprep.subr.bf16.mxu0 0
        %1026 = vmatpush1.bf16.msra.mxu0 0
        %1027 = vmatprep.subr.bf16.mxu0 0
        %1028 = vmatpush1.bf16.msra.mxu0 0
        %1029 = vmatprep.subr.bf16.mxu0 0
        %1030 = vmatpush1.bf16.msra.mxu0 0
        %1031 = vmatprep.subr.bf16.mxu0 0
        %1032 = vmatpush1.bf16.msra.mxu0 0
        %1033 = vmatprep.subr.bf16.mxu0 0
        %1034 = vmatpush1.bf16.msra.mxu0 0
        %1035 = vmatprep.subr.bf16.mxu0 0
        %1036 = vmatpush1.bf16.msra.mxu0 0
        %1037 = vmatprep.subr.bf16.mxu0 0
        %1038 = vmatpush1.bf16.msra.mxu0 0
        %1039 = vmatprep.subr.bf16.mxu0 0
        %1040 = vmatpush1.bf16.msra.mxu0 0
        %1041 = vmatprep.subr.bf16.mxu0 0
        %1042 = vmatpush1.bf16.msra.mxu0 0
        %1043 = vmatprep.subr.bf16.mxu0 0
        %1044 = vmatpush1.bf16.msra.mxu0 0
        %1045 = vmatprep.subr.bf16.mxu0 0
        %1046 = vmatpush1.bf16.msra.mxu0 0
        %1047 = vmatprep.subr.bf16.mxu0 0
        %1048 = vmatpush1.bf16.msra.mxu0 0
        %1049 = vmatprep.subr.bf16.mxu0 0
        %1050 = vmatpush1.bf16.msra.mxu0 0
        %1051 = vmatprep.subr.bf16.mxu0 0
        %1052 = vmatpush1.bf16.msra.mxu0 0
        %1053 = vmatprep.mubr.bf16.mxu0 0
        %1054 = vmatmul.mubr.bf16.gmra.mrb[0].mxu0 %v1019
        %v1055 = vpop.f32.mrb[0].mxu0
        %v1056 = vadd.f32 0.0, %v1055
        %v1057 = vpop.f32.mrb[0].mxu0
        %v1058 = vpop.f32.mrb[0].mxu0
        %v1059 = vpop.f32.mrb[0].mxu0
        %1060 = vdwg.mxu0
        %v1061 = vadd.f32 %v952, %v1056
        %v1062 = vadd.f32 %v434, %v1061
        %v1063 = vsel %vm437, %v1062, 0.0
        %1064 = vadd.xlane.f32.xlu0 %v1063
        %v1065 = vpop.xlane.xlu0 %1064
        %v1066 = vmul.f32 %v1065, %v441
        %v1067 = vsub.f32 %v1062, %v1066
        %v1068 = vmul.f32 %v1067, %v1067
        %v1069 = vsel %vm437, %v1068, 0.0
        %1070 = vadd.xlane.f32.xlu0 %v1069
        %v1071 = vpop.xlane.xlu0 %1070
        %v1072 = vmul.f32 %v1071, %v441
        %v1073 = vadd.f32 %v1072, 1e-05
        %v1074 = vrsqrt.pop %v1073
        %v1075 = vmul.f32 %v1067, %v1074
        %v1076 = vpack.c.bf16 %v1075, %v1075
        %v1077 = vld [vmem:[%s6] sm:$0xf]
        %v1078 = vld [vmem:[%s6 + $0x4] sm:$0xf]
        %v1079 = vld [vmem:[%s6 + $0x8] sm:$0xf]
        %v1080 = vld [vmem:[%s6 + $0xc] sm:$0xf]
        %v1081 = vld [vmem:[%s7] sm:$0x1]
        %v1083 = vlaneseq
        %v1084 = vshrl.u32 %v1083, 7
        %v1085 = vsub.s32 0, %v1084
        %v1086 = vrot.slane %v1081, %v1085
        %v1092 = vunpack.c.l.b16 %v1077
        %v1093 = vunpack.c.l.b16 %v1078
        %v1094 = vunpack.c.l.b16 %v1079
        %v1095 = vunpack.c.l.b16 %v1080
        %v1096 = vpack.c.b16 %v1093, %v1092
        %v1097 = vpack.c.b16 %v1095, %v1094
        %v1101 = vsel %vm437, %v1076, 0
        %1103 = vmatprep.subr.bf16.mxu0 0
        %1104 = vmatpush1.bf16.msra.mxu0 %v1096
        %1105 = vmatprep.subr.bf16.mxu0 0
        %1106 = vmatpush1.bf16.msra.mxu0 %v1097
        %1107 = vmatprep.subr.bf16.mxu0 0
        %1108 = vmatpush1.bf16.msra.mxu0 0
        %1109 = vmatprep.subr.bf16.mxu0 0
        %1110 = vmatpush1.bf16.msra.mxu0 0
        %1111 = vmatprep.subr.bf16.mxu0 0
        %1112 = vmatpush1.bf16.msra.mxu0 0
        %1113 = vmatprep.subr.bf16.mxu0 0
        %1114 = vmatpush1.bf16.msra.mxu0 0
        %1115 = vmatprep.subr.bf16.mxu0 0
        %1116 = vmatpush1.bf16.msra.mxu0 0
        %1117 = vmatprep.subr.bf16.mxu0 0
        %1118 = vmatpush1.bf16.msra.mxu0 0
        %1119 = vmatprep.subr.bf16.mxu0 0
        %1120 = vmatpush1.bf16.msra.mxu0 0
        %1121 = vmatprep.subr.bf16.mxu0 0
        %1122 = vmatpush1.bf16.msra.mxu0 0
        %1123 = vmatprep.subr.bf16.mxu0 0
        %1124 = vmatpush1.bf16.msra.mxu0 0
        %1125 = vmatprep.subr.bf16.mxu0 0
        %1126 = vmatpush1.bf16.msra.mxu0 0
        %1127 = vmatprep.subr.bf16.mxu0 0
        %1128 = vmatpush1.bf16.msra.mxu0 0
        %1129 = vmatprep.subr.bf16.mxu0 0
        %1130 = vmatpush1.bf16.msra.mxu0 0
        %1131 = vmatprep.subr.bf16.mxu0 0
        %1132 = vmatpush1.bf16.msra.mxu0 0
        %1133 = vmatprep.subr.bf16.mxu0 0
        %1134 = vmatpush1.bf16.msra.mxu0 0
        %1135 = vmatprep.mubr.bf16.mxu0 0
        %1136 = vmatmul.mubr.bf16.gmra.mrb[0].mxu0 %v1101
        %v1137 = vpop.f32.mrb[0].mxu0
        %v1138 = vadd.f32 %v1086, %v1137
        %v1139 = vpop.f32.mrb[0].mxu0
        %v1140 = vpop.f32.mrb[0].mxu0
        %v1141 = vpop.f32.mrb[0].mxu0
        %1142 = vdwg.mxu0
        %v1143 = vmax.f32 %v1138, 0.0
        %v1144 = vpack.c.bf16 %v1143, %v1143
        %v1145 = vld [vmem:[#allocation10] sm:$0xf]
        %v1146 = vld [vmem:[#allocation10 + $0x4] sm:$0xf]
        %v1147 = vld [vmem:[#allocation10 + $0x8] sm:$0xf]
        %v1148 = vld [vmem:[#allocation10 + $0xc] sm:$0xf]
        %v1149 = vld [vmem:[%s9] sm:$0x1]
        %v1151 = vlaneseq
        %v1152 = vshrl.u32 %v1151, 7
        %v1153 = vsub.s32 0, %v1152
        %v1154 = vrot.slane %v1149, %v1153
        %v1160 = vunpack.c.l.b16 %v1145
        %v1161 = vunpack.c.l.b16 %v1146
        %v1162 = vunpack.c.l.b16 %v1147
        %v1163 = vunpack.c.l.b16 %v1148
        %v1164 = vpack.c.b16 %v1161, %v1160
        %v1165 = vpack.c.b16 %v1163, %v1162
        %v1169 = vsel %vm437, %v1144, 0
        %1171 = vmatprep.subr.bf16.mxu0 0
        %1172 = vmatpush1.bf16.msra.mxu0 %v1164
        %1173 = vmatprep.subr.bf16.mxu0 0
        %1174 = vmatpush1.bf16.msra.mxu0 %v1165
        %1175 = vmatprep.subr.bf16.mxu0 0
        %1176 = vmatpush1.bf16.msra.mxu0 0
        %1177 = vmatprep.subr.bf16.mxu0 0
        %1178 = vmatpush1.bf16.msra.mxu0 0
        %1179 = vmatprep.subr.bf16.mxu0 0
        %1180 = vmatpush1.bf16.msra.mxu0 0
        %1181 = vmatprep.subr.bf16.mxu0 0
        %1182 = vmatpush1.bf16.msra.mxu0 0
        %1183 = vmatprep.subr.bf16.mxu0 0
        %1184 = vmatpush1.bf16.msra.mxu0 0
        %1185 = vmatprep.subr.bf16.mxu0 0
        %1186 = vmatpush1.bf16.msra.mxu0 0
        %1187 = vmatprep.subr.bf16.mxu0 0
        %1188 = vmatpush1.bf16.msra.mxu0 0
        %1189 = vmatprep.subr.bf16.mxu0 0
        %1190 = vmatpush1.bf16.msra.mxu0 0
        %1191 = vmatprep.subr.bf16.mxu0 0
        %1192 = vmatpush1.bf16.msra.mxu0 0
        %1193 = vmatprep.subr.bf16.mxu0 0
        %1194 = vmatpush1.bf16.msra.mxu0 0
        %1195 = vmatprep.subr.bf16.mxu0 0
        %1196 = vmatpush1.bf16.msra.mxu0 0
        %1197 = vmatprep.subr.bf16.mxu0 0
        %1198 = vmatpush1.bf16.msra.mxu0 0
        %1199 = vmatprep.subr.bf16.mxu0 0
        %1200 = vmatpush1.bf16.msra.mxu0 0
        %1201 = vmatprep.subr.bf16.mxu0 0
        %1202 = vmatpush1.bf16.msra.mxu0 0
        %1203 = vmatprep.mubr.bf16.mxu0 0
        %1204 = vmatmul.mubr.bf16.gmra.mrb[0].mxu0 %v1169
        %v1205 = vpop.f32.mrb[0].mxu0
        %v1206 = vadd.f32 %v1154, %v1205
        %v1207 = vpop.f32.mrb[0].mxu0
        %v1208 = vpop.f32.mrb[0].mxu0
        %v1209 = vpop.f32.mrb[0].mxu0
        %1210 = vdwg.mxu0
        %v1211 = vadd.f32 %v1062, %v1206
        %1212 = vst.msk [vmem:[%s432] sm:$0xff] %vm437, %v1211
        %s1213 = sand.u32 %s252, 1
        %s1214 = scalar_lea.sflag [#allocation4], %s1213
        %s1215 = sand.u32 %s252, 1
        %s1216 = smul.addr %s1215, 8
        %s1217 = scalar_lea.vmem [#allocation11], %s1216
        // Predicated region
        $region81: #{tpu_custom_call.1} parent=59 // pred_check
          %p1218 = pneg %p262
        $region82: #{tpu_custom_call.1} parent=59 // pred_check_branch
          %1220 = sbr.rel (%p1218) target = $region84
        $region83: #{tpu_custom_call.1} parent=59 // pred_region
          %s1222 = ssub.s32 128, 128
          %1223 = vsyncadd %s1214, %s1222
          %s1224 = smul.addr %s29, 128
          %s1225 = scalar_lea.hbm %s10, %s1224
          %s1227 = sshll.u32 %s1217, 4
          %s1228 = int_to_ptr.vmem [resolvable:$true] %s1227
          %1230 = dma.vmem_to_hbm [thread:$0]  %s1228, 128, %s1225, %s1214
        $region84: #{tpu_custom_call.1} parent=59 // pred_fallthru
          _
      $region60: #{tpu_custom_call.1} parent=5 // pred_fallthru
        _
      %p1231 = scmp.le.s32.totalorder 2, %s24
      // Predicated region
      $region85: #{tpu_custom_call.1} parent=5 // pred_check
        %p1232 = pneg %p1231
      $region86: #{tpu_custom_call.1} parent=5 // pred_check_branch
        %1234 = sbr.rel (%p1232) target = $region88
      $region87: #{tpu_custom_call.1} parent=5 // pred_region
        %s1235 = ssub.s32 %s24, 2
        // Predicated region
        $region89: #{tpu_custom_call.1} parent=87 // pred_check
          %p1236 = pneg %p268
        $region90: #{tpu_custom_call.1} parent=87 // pred_check_branch
          %1238 = sbr.rel (%p1236) target = $region92
        $region91: #{tpu_custom_call.1} parent=87 // pred_region
          %s1239 = sand.u32 %s253, 1
          %s1240 = scalar_lea.sflag [#allocation4], %s1239
          %s1241 = sand.u32 %s253, 1
          %s1242 = smul.addr %s1241, 8
          %s1243 = scalar_lea.vmem [#allocation11], %s1242
          %1244 = dma.done %s1240, 128
        $region92: #{tpu_custom_call.1} parent=87 // pred_fallthru
          _
      $region88: #{tpu_custom_call.1} parent=5 // pred_fallthru
        _
    $region6: #{tpu_custom_call.1} parent=1 // loop_footer
      %s28 = sadd.s32 1, %s24
    $region7: #{tpu_custom_call.1} parent=1 // loop_footer_branch
      %23 = sbr.rel target = $region3
    $region8: #{tpu_custom_call.1} parent=1 // loop_exit
      _
    %1245 = vsyncpa [#allocation3], 1
    %s1246 = scalar_lea.sflag [#allocation3], 1
    %1247 = vsyncpa %s1246, 1
    %1248 = vsyncpa [#allocation6], 1
    %1249 = vsyncpa [#allocation9], 1
    %1250 = vsyncpa [#allocation4], 1
    %s1251 = scalar_lea.sflag [#allocation4], 1
    %1252 = vsyncpa %s1251, 1

</llo_original>
